<compile_context>
chip_gen: v7x
topology: tpu7x:2x2x1
jax: 0.10.0
libtpu: 0.0.40
codegen_flags: <defaults>
</compile_context>

<pallas_src>
import numpy as np
import jax
import jax.numpy as jnp
from jax.experimental import pallas as pl
from jax.experimental.pallas import tpu as pltpu


# ----------------------------------------------------------------------------
# Pallas kernel
# ----------------------------------------------------------------------------
def _group_sum_lanes(x, c):
    """Sum (rows, lanes) over lane groups {l : l % c fixed}, broadcast back.

    Implemented as a dot with a 0/1 indicator matrix so the grouped cross-lane
    reduction stays on the MXU (no narrow-lane intermediates / relayouts).
    """
    lanes = x.shape[-1]
    ri = jax.lax.broadcasted_iota(jnp.int32, (lanes, lanes), 0)
    ci = jax.lax.broadcasted_iota(jnp.int32, (lanes, lanes), 1)
    g = (ri % c == ci % c).astype(jnp.float32)
    return jnp.dot(x, g, preferred_element_type=jnp.float32)


def _stream_body(x_refs, w_refs, gamma_ref, beta_ref, o_ref, c, count, eps):
    """One octave output stream: sum of branch matmuls + BN(train) + ReLU."""
    acc = None
    for x_ref, w_ref in zip(x_refs, w_refs):          # 1-2 MXU dots, K=120/216
        d = jnp.dot(x_ref[...], w_ref[...], preferred_element_type=jnp.float32)
        acc = d if acc is None else acc + d           # (rows, lanes), f32

    inv_cnt = 1.0 / float(count)
    # Two-pass batch statistics (mean, then centered variance): acc is live in
    # vregs so the second pass is free and avoids E[x^2]-E[x]^2 cancellation.
    s1 = jnp.sum(_group_sum_lanes(acc, c), axis=0, keepdims=True)       # (1, lanes)
    mean = s1 * inv_cnt
    centered = acc - mean
    s2 = jnp.sum(_group_sum_lanes(centered * centered, c), axis=0, keepdims=True)
    var = s2 * inv_cnt                                # biased (PyTorch train mode)
    scale = gamma_ref[...] * jax.lax.rsqrt(var + eps)
    shift = beta_ref[...] - mean * scale
    o_ref[...] = jnp.maximum(acc * scale + shift, 0.0).astype(o_ref.dtype)


def _make_octave_kernel(branch_counts, channels, counts, eps):
    """Fused kernel over up to two output streams.

    Ref order (positional): x refs (stream-major), w refs (stream-major),
    gamma refs, beta refs, output refs.
    """
    n_streams = len(branch_counts)

    def kernel(*refs):
        i = 0
        xs = []
        for nb in branch_counts:
            xs.append(refs[i:i + nb]); i += nb
        ws = []
        for nb in branch_counts:
            ws.append(refs[i:i + nb]); i += nb
        gammas = refs[i:i + n_streams]; i += n_streams
        betas = refs[i:i + n_streams]; i += n_streams
        outs = refs[i:i + n_streams]
        for s in range(n_streams):
            _stream_body(xs[s], ws[s], gammas[s], betas[s], outs[s],
                         channels[s], counts[s], eps)

    return kernel


def _fused_octave_pallas(stream_xs, stream_ws, gammas, betas,
                         channels, counts, out_rows, out_lanes, eps):
    """Single pallas_call: all conv branches + branch add + BN(train) + ReLU."""
    branch_counts = tuple(len(b) for b in stream_xs)
    operands = ([x for s in stream_xs for x in s]
                + [w for s in stream_ws for w in s]
                + list(gammas) + list(betas))
    out_shape = tuple(jax.ShapeDtypeStruct((r, l), jnp.float32)
                      for r, l in zip(out_rows, out_lanes))
    # Whole problem in one grid step: everything fits VMEM at these shapes and
    # the batch statistics need a full-batch view anyway.
    # TODO(synk): for large images, tile rows over a second grid axis with
    # per-tile partial stats + cross-core reduction (v7x dual TensorCore), and
    # re-derive the Toeplitz-weight / VMEM budget against v7x's 64 MiB.
    return pl.pallas_call(
        _make_octave_kernel(branch_counts, channels, counts, eps),
        out_shape=out_shape,
        grid_spec=pltpu.PrefetchScalarGridSpec(
            num_scalar_prefetch=0,
            grid=(1,),
            in_specs=[pl.BlockSpec(op.shape, lambda i: (0, 0)) for op in operands],
            out_specs=tuple(pl.BlockSpec(s.shape, lambda i: (0, 0))
                            for s in out_shape),
        ),
        compiler_params=pltpu.CompilerParams(
            dimension_semantics=("arbitrary",)),
    )(*operands)


# ----------------------------------------------------------------------------
# Host-side weight / input preparation
# ----------------------------------------------------------------------------
def _expand_weight(w_hwio, wp, wo, rep=1, upsample=False):
    """Toeplitz/im2col-expand a stride-1 conv weight.

    (KH, KW, Cin, Cout) -> (KH*Wp*Cin, Wo*Cout*rep) so that, with the padded
    input im2col'd as rows (N*Ho, KH*Wp*Cin), a single MXU dot produces a
    lane-dense (Wo*Cout*rep) output row.  upsample=True bakes the nearest-2x
    W-upsample into the weight (wo is then the high-res width).  rep>1
    replicates the output lanes so small streams store full 128-lane rows.
    Done once per input shape, host-side.  Blow-up ~KH*Wo: fine for the tiny
    channel counts of octave conv; use plain im2col (K=KH*KW*Cin) for large
    Cin*Cout*W layers.
    """
    kh_n, kw_n, cin, cout = w_hwio.shape
    w_np = np.asarray(w_hwio, dtype=np.float32)
    big = np.zeros((kh_n * wp * cin, wo * cout), np.float32)
    for kh in range(kh_n):
        base = kh * wp * cin
        for kw in range(kw_n):
            for w in range(wo):
                src = (w // 2 if upsample else w) + kw
                big[base + src * cin: base + (src + 1) * cin,
                    w * cout:(w + 1) * cout] = w_np[kh, kw]
    if rep > 1:
        big = np.tile(big, (1, rep))
    return jnp.asarray(big, dtype=jnp.bfloat16)


def _lane_rep(lanes):
    """Replication factor that makes the output rows 128-lane dense."""
    if lanes >= 128 or 128 % lanes != 0:
        return 1
    return 128 // lanes


def _im2col_rows(x_nhwc, pad, kh_n):
    """NHWC -> (N, Ho, KH*Wp*C) row im2col of the zero-padded input."""
    xp = jnp.pad(x_nhwc, ((0, 0), (pad, pad), (pad, pad), (0, 0)))
    n, hp, wp, c = xp.shape
    xr = xp.reshape(n, hp, wp * c)
    ho = hp - kh_n + 1
    return jnp.concatenate([xr[:, kh:kh + ho, :] for kh in range(kh_n)], axis=-1)


def avg_pool_2x(x):                               # NHWC, matches nn.AvgPool2d(2)
    n, h, w, c = x.shape
    return x.reshape(n, h // 2, 2, w // 2, 2, c).mean(axis=(2, 4))


# ----------------------------------------------------------------------------
# Module
# ----------------------------------------------------------------------------
def _init_conv(key, cin, cout, k):
    """Deterministic Conv2d init (PyTorch-style uniform(-1/sqrt(fan_in), .))."""
    kw_key, kb_key = jax.random.split(key)
    bound = 1.0 / float((cin * k * k) ** 0.5)
    w = jax.random.uniform(kw_key, (cout, cin, k, k), jnp.float32, -bound, bound)
    b = jax.random.uniform(kb_key, (cout,), jnp.float32, -bound, bound)
    return jnp.transpose(w, (2, 3, 1, 0)), b      # -> (KH, KW, Cin, Cout)


class NormalOctaveConvPallas:
    def __init__(self, Lin, Hin, Lout, Hout, kernel, stride=1, padding=0,
                 alpha=0.75, key=None):
        assert stride == 1, "only stride=1 implemented"  # TODO(synk): stride>1, dilation, groups
        self.kernel = kernel
        self.padding = padding
        self.Lout, self.Hout = Lout, Hout
        self.eps = 1e-5
        k0, k1, k2, k3 = jax.random.split(key, 4)
        self.convL2L = _init_conv(k0, Lin, Lout, kernel) if (Lin and Lout) else None
        self.convH2L = _init_conv(k1, Hin, Lout, kernel) if Lout else None
        self.convL2H = _init_conv(k2, Lin, Hout, kernel) if Lin else None
        self.convH2H = _init_conv(k3, Hin, Hout, kernel)
        # BatchNorm2d default parameters (weight=1, bias=0)
        self.gamma_l = jnp.ones((Lout,), jnp.float32)
        self.beta_l = jnp.zeros((Lout,), jnp.float32)
        self.gamma_h = jnp.ones((Hout,), jnp.float32)
        self.beta_h = jnp.zeros((Hout,), jnp.float32)
        self._cache = {}                           # shape key -> (jitted fwd, params)

    # -- build one fused, jitted forward per input-shape signature ----------
    def _build_forward(self, l_shape, h_shape):
        k, p = self.kernel, self.padding
        Lout, Hout, eps = self.Lout, self.Hout, self.eps
        has_l2l = self.convL2L is not None
        has_h2l = self.convH2L is not None
        has_l2h = self.convL2H is not None

        n, _, h_h, w_h = h_shape
        assert h_h % 2 == 0 and w_h % 2 == 0, "AvgPool2d(2) needs even H/W"
        h_l, w_l = h_h // 2, w_h // 2
        if l_shape is not None and (has_l2l or has_l2h):
            assert tuple(l_shape[2:]) == (h_l, w_l), \
                "low-frequency input must be half the high-frequency size"
        ho_h, wo_h = h_h + 2 * p - k + 1, w_h + 2 * p - k + 1
        ho_l, wo_l = h_l + 2 * p - k + 1, w_l + 2 * p - k + 1
        wph, wpl = w_h + 2 * p, w_l + 2 * p
        if has_l2h:
            assert ho_h == 2 * ho_l and wo_h == 2 * wo_l, \
                "up2x(L2H) must match H2H; requires kernel == 2*padding + 1"

        rep_h = _lane_rep(wo_h * Hout)
        rep_l = _lane_rep(wo_l * Lout) if Lout else 1
        lanes_h = wo_h * Hout * rep_h
        lanes_l = wo_l * Lout * rep_l

        # Toeplitz/im2col-expanded bf16 weights (host numpy, once per shape).
        # NOTE: conv biases are intentionally dropped — the training-mode BN
        # batch-mean subtraction that always follows cancels them exactly.
        wts = {"h2h": _expand_weight(self.convH2H[0], wph, wo_h, rep_h)}
        if has_l2h:
            wts["l2h"] = _expand_weight(self.convL2H[0], wpl, wo_h, rep_h,
                                        upsample=True)
        if has_l2l:
            wts["l2l"] = _expand_weight(self.convL2L[0], wpl, wo_l, rep_l)
        if has_h2l:
            wts["h2l"] = _expand_weight(self.convH2L[0], wpl, wo_l, rep_l)

        params = dict(w=wts, gamma_l=self.gamma_l, beta_l=self.beta_l,
                      gamma_h=self.gamma_h, beta_h=self.beta_h)

        def forward(params, Lx_nchw, Hx_nchw):
            w = params["w"]
            Hx = jnp.transpose(Hx_nchw, (0, 2, 3, 1))            # NHWC
            hx_i2c = _im2col_rows(Hx, p, k)                      # (N, ho_h, k*wph*Hin)
            if has_l2l or has_l2h:
                Lx = jnp.transpose(Lx_nchw, (0, 2, 3, 1))
                lx_i2c = _im2col_rows(Lx, p, k)                  # (N, ho_l, k*wpl*Lin)

            cdt = jnp.bfloat16
            stream_xs, stream_ws, gammas, betas = [], [], [], []
            channels, counts, out_rows, out_lanes = [], [], [], []

            if Lout != 0:                                        # low-frequency stream
                xs, wsl = [], []
                if has_l2l:
                    xs.append(lx_i2c.reshape(n * ho_l, -1).astype(cdt))
                    wsl.append(w["l2l"])
                if has_h2l:
                    hp_i2c = _im2col_rows(avg_pool_2x(Hx), p, k)
                    xs.append(hp_i2c.reshape(n * ho_l, -1).astype(cdt))
                    wsl.append(w["h2l"])
                stream_xs.append(xs); stream_ws.append(wsl)
                gammas.append(jnp.tile(params["gamma_l"], wo_l * rep_l)
                              .reshape(1, lanes_l))
                betas.append(jnp.tile(params["beta_l"], wo_l * rep_l)
                             .reshape(1, lanes_l))
                channels.append(Lout); counts.append(n * ho_l * wo_l * rep_l)
                out_rows.append(n * ho_l); out_lanes.append(lanes_l)

            xs = [hx_i2c.reshape(n * ho_h, -1).astype(cdt)]      # high-frequency stream
            wsh = [w["h2h"]]
            if has_l2h:
                # nearest-2x H-upsample baked into the im2col: row i -> low row i//2
                xs.append(jnp.repeat(lx_i2c, 2, axis=1)
                          .reshape(n * ho_h, -1).astype(cdt))
                wsh.append(w["l2h"])
            stream_xs.append(xs); stream_ws.append(wsh)
            gammas.append(jnp.tile(params["gamma_h"], wo_h * rep_h)
                          .reshape(1, lanes_h))
            betas.append(jnp.tile(params["beta_h"], wo_h * rep_h)
                         .reshape(1, lanes_h))
            channels.append(Hout); counts.append(n * ho_h * wo_h * rep_h)
            out_rows.append(n * ho_h); out_lanes.append(lanes_h)

            outs = _fused_octave_pallas(stream_xs, stream_ws, gammas, betas,
                                        tuple(channels), tuple(counts),
                                        tuple(out_rows), tuple(out_lanes), eps)

            idx = 0
            Lx_out = 0
            if Lout != 0:
                y_l = outs[idx][:, :wo_l * Lout].reshape(n, ho_l, wo_l, Lout)
                Lx_out = jnp.transpose(y_l, (0, 3, 1, 2))        # NCHW
                idx += 1
            y_h = outs[idx][:, :wo_h * Hout].reshape(n, ho_h, wo_h, Hout)
            Hx_out = jnp.transpose(y_h, (0, 3, 1, 2))            # NCHW
            # TODO(synk): when stacking octave layers, keep the lane-dense
            # (N*Ho, Wo*C) layout between layers instead of going back to NCHW.
            return Lx_out, Hx_out

        return jax.jit(forward), params

    def __call__(self, x):
        Lx_nchw, Hx_nchw = x
        key = (None if Lx_nchw is None else tuple(Lx_nchw.shape),
               tuple(Hx_nchw.shape))
        if key not in self._cache:
            self._cache[key] = self._build_forward(
                None if Lx_nchw is None else Lx_nchw.shape, Hx_nchw.shape)
        fwd, params = self._cache[key]
        return fwd(params, Lx_nchw, Hx_nchw)


# ----------------------------------------------------------------------------
# Pure-JAX reference (for self-check)
# ----------------------------------------------------------------------------
def _upsample_nearest_2x(x):                      # NHWC, reference only
    return jnp.repeat(jnp.repeat(x, 2, axis=1), 2, axis=2)


def _ref_conv(x, w_hwio, b, padding):
    y = jax.lax.conv_general_dilated(
        x, w_hwio, window_strides=(1, 1),
        padding=[(padding, padding), (padding, padding)],
        dimension_numbers=("NHWC", "HWIO", "NHWC"),
        precision=jax.lax.Precision.HIGHEST)
    return y + b


def _ref_bn_relu(x, gamma, beta, eps=1e-5):
    mean = x.mean(axis=(0, 1, 2))
    var = ((x - mean) ** 2).mean(axis=(0, 1, 2))
    return jnp.maximum((x - mean) / jnp.sqrt(var + eps) * gamma + beta, 0.0)


def _ref_forward(mod, Lx_nchw, Hx_nchw):
    Lx = jnp.transpose(Lx_nchw, (0, 2, 3, 1))
    Hx = jnp.transpose(Hx_nchw, (0, 2, 3, 1))
    p = mod.padding
    L2Ly = _ref_conv(Lx, *mod.convL2L, padding=p)
    L2Hy = _upsample_nearest_2x(_ref_conv(Lx, *mod.convL2H, padding=p))
    H2Ly = _ref_conv(avg_pool_2x(Hx), *mod.convH2L, padding=p)
    H2Hy = _ref_conv(Hx, *mod.convH2H, padding=p)
    Lo = _ref_bn_relu(L2Ly + H2Ly, mod.gamma_l, mod.beta_l)
    Ho = _ref_bn_relu(L2Hy + H2Hy, mod.gamma_h, mod.beta_h)
    return (jnp.transpose(Lo, (0, 3, 1, 2)), jnp.transpose(Ho, (0, 3, 1, 2)))


# ----------------------------------------------------------------------------
if __name__ == "__main__":
    key = jax.random.PRNGKey(0)
    k_in_l, k_in_h, k_params = jax.random.split(key, 3)

    # batch=2, Lin=Hin=4, Lout=Hout=8, high-freq 16x16, low-freq 8x8, k=3, p=1
    N, Lin, Hin, Lout, Hout = 2, 4, 4, 8, 8
    Lx = jax.random.normal(k_in_l, (N, Lin, 8, 8), jnp.float32)     # NCHW
    Hx = jax.random.normal(k_in_h, (N, Hin, 16, 16), jnp.float32)   # NCHW

    mod = NormalOctaveConvPallas(Lin, Hin, Lout, Hout, kernel=3,
                                 stride=1, padding=1, key=k_params)

    Lo, Ho = mod((Lx, Hx))
    Lo = jax.block_until_ready(Lo)
    Ho = jax.block_until_ready(Ho)

    # Self-check against a full-precision pure-JAX reference.  The Pallas path
    # feeds the MXU with bf16 inputs (f32 accumulation), so allow ~3e-2.
    Lo_ref, Ho_ref = _ref_forward(mod, Lx, Hx)
    assert Lo.shape == (N, Lout, 8, 8) and Ho.shape == (N, Hout, 16, 16)
    assert jnp.allclose(Lo, Lo_ref, atol=3e-2, rtol=3e-2), "low-freq mismatch"
    assert jnp.allclose(Ho, Ho_ref, atol=3e-2, rtol=3e-2), "high-freq mismatch"

    print("KERNEL_OK")
</pallas_src>

<mosaic_0001>
module attributes {stable_mosaic.version = 11 : i64} {
  func.func @kernel(%arg0: i32, %arg1: memref<16x120xbf16, #tpu.memory_space<vmem>>, %arg2: memref<16x120xbf16, #tpu.memory_space<vmem>>, %arg3: memref<32x216xbf16, #tpu.memory_space<vmem>>, %arg4: memref<32x120xbf16, #tpu.memory_space<vmem>>, %arg5: memref<120x128xbf16, #tpu.memory_space<vmem>>, %arg6: memref<120x128xbf16, #tpu.memory_space<vmem>>, %arg7: memref<216x128xbf16, #tpu.memory_space<vmem>>, %arg8: memref<120x128xbf16, #tpu.memory_space<vmem>>, %arg9: memref<1x128xf32, #tpu.memory_space<vmem>>, %arg10: memref<1x128xf32, #tpu.memory_space<vmem>>, %arg11: memref<1x128xf32, #tpu.memory_space<vmem>>, %arg12: memref<1x128xf32, #tpu.memory_space<vmem>>, %arg13: memref<16x128xf32, #tpu.memory_space<vmem>>, %arg14: memref<32x128xf32, #tpu.memory_space<vmem>>) attributes {dimension_semantics = [#tpu.dimension_semantics<arbitrary>], iteration_bounds = array<i64: 1>, scalar_prefetch = 0 : i64, scratch_operands = 0 : i64, tpu.core_type = #tpu.core_type<tc>, window_params = [{pipeline_mode = #tpu.pipeline_mode<synchronous>, transform_indices = @transform_0, window_bounds = array<i64: 16, 120>}, {pipeline_mode = #tpu.pipeline_mode<synchronous>, transform_indices = @transform_1, window_bounds = array<i64: 16, 120>}, {pipeline_mode = #tpu.pipeline_mode<synchronous>, transform_indices = @transform_2, window_bounds = array<i64: 32, 216>}, {pipeline_mode = #tpu.pipeline_mode<synchronous>, transform_indices = @transform_3, window_bounds = array<i64: 32, 120>}, {pipeline_mode = #tpu.pipeline_mode<synchronous>, transform_indices = @transform_4, window_bounds = array<i64: 120, 128>}, {pipeline_mode = #tpu.pipeline_mode<synchronous>, transform_indices = @transform_5, window_bounds = array<i64: 120, 128>}, {pipeline_mode = #tpu.pipeline_mode<synchronous>, transform_indices = @transform_6, window_bounds = array<i64: 216, 128>}, {pipeline_mode = #tpu.pipeline_mode<synchronous>, transform_indices = @transform_7, window_bounds = array<i64: 120, 128>}, {pipeline_mode = #tpu.pipeline_mode<synchronous>, transform_indices = @transform_8, window_bounds = array<i64: 1, 128>}, {pipeline_mode = #tpu.pipeline_mode<synchronous>, transform_indices = @transform_9, window_bounds = array<i64: 1, 128>}, {pipeline_mode = #tpu.pipeline_mode<synchronous>, transform_indices = @transform_10, window_bounds = array<i64: 1, 128>}, {pipeline_mode = #tpu.pipeline_mode<synchronous>, transform_indices = @transform_11, window_bounds = array<i64: 1, 128>}, {pipeline_mode = #tpu.pipeline_mode<synchronous>, transform_indices = @transform_12, window_bounds = array<i64: 16, 128>}, {pipeline_mode = #tpu.pipeline_mode<synchronous>, transform_indices = @transform_13, window_bounds = array<i64: 32, 128>}]} {
    %c0 = arith.constant 0 : index
    %c0_0 = arith.constant 0 : index
    %0 = vector.load %arg1[%c0, %c0_0] : memref<16x120xbf16, #tpu.memory_space<vmem>>, vector<16x120xbf16>
    %c0_1 = arith.constant 0 : index
    %c0_2 = arith.constant 0 : index
    %1 = vector.load %arg5[%c0_1, %c0_2] : memref<120x128xbf16, #tpu.memory_space<vmem>>, vector<120x128xbf16>
    %cst = arith.constant dense<0.000000e+00> : vector<16x128xf32>
    %2 = tpu.matmul %0, %1, %cst {dimension_numbers = #tpu.dot_dimension_numbers<[1], [0], [0], [1], [0, 0, 1, 1], [], []>} : vector<16x120xbf16>, vector<120x128xbf16>, vector<16x128xf32> -> vector<16x128xf32>
    %c0_3 = arith.constant 0 : index
    %c0_4 = arith.constant 0 : index
    %3 = vector.load %arg2[%c0_3, %c0_4] : memref<16x120xbf16, #tpu.memory_space<vmem>>, vector<16x120xbf16>
    %c0_5 = arith.constant 0 : index
    %c0_6 = arith.constant 0 : index
    %4 = vector.load %arg6[%c0_5, %c0_6] : memref<120x128xbf16, #tpu.memory_space<vmem>>, vector<120x128xbf16>
    %cst_7 = arith.constant dense<0.000000e+00> : vector<16x128xf32>
    %5 = tpu.matmul %3, %4, %cst_7 {dimension_numbers = #tpu.dot_dimension_numbers<[1], [0], [0], [1], [0, 0, 1, 1], [], []>} : vector<16x120xbf16>, vector<120x128xbf16>, vector<16x128xf32> -> vector<16x128xf32>
    %6 = arith.addf %2, %5 : vector<16x128xf32>
    %7 = tpu.iota {dimensions = array<i32: 0>} : vector<128x128xi32>
    %8 = tpu.iota {dimensions = array<i32: 1>} : vector<128x128xi32>
    %c8_i32 = arith.constant 8 : i32
    %c0_i32 = arith.constant 0 : i32
    %9 = arith.cmpi eq, %c8_i32, %c0_i32 : i32
    %c1_i32 = arith.constant 1 : i32
    %10 = arith.select %9, %c1_i32, %c8_i32 : i32
    %11 = vector.broadcast %10 : i32 to vector<128x128xi32>
    %12 = arith.remsi %7, %11 : vector<128x128xi32>
    %c0_i32_8 = arith.constant 0 : i32
    %13 = vector.broadcast %c0_i32_8 : i32 to vector<128x128xi32>
    %14 = arith.cmpi ne, %12, %13 : vector<128x128xi32>
    %c0_i32_9 = arith.constant 0 : i32
    %15 = vector.broadcast %c0_i32_9 : i32 to vector<128x128xi32>
    %16 = arith.cmpi slt, %12, %15 : vector<128x128xi32>
    %c0_i32_10 = arith.constant 0 : i32
    %17 = arith.cmpi slt, %10, %c0_i32_10 : i32
    %18 = vector.broadcast %17 : i1 to vector<128x128xi1>
    %19 = vector.broadcast %18 : vector<128x128xi1> to vector<128x128xi1>
    %20 = arith.xori %16, %19 : vector<128x128xi1>
    %21 = arith.andi %20, %14 : vector<128x128xi1>
    %22 = vector.broadcast %10 : i32 to vector<128x128xi32>
    %23 = arith.addi %12, %22 : vector<128x128xi32>
    %24 = arith.select %21, %23, %12 : vector<128x128xi1>, vector<128x128xi32>
    %c8_i32_11 = arith.constant 8 : i32
    %c0_i32_12 = arith.constant 0 : i32
    %25 = arith.cmpi eq, %c8_i32_11, %c0_i32_12 : i32
    %c1_i32_13 = arith.constant 1 : i32
    %26 = arith.select %25, %c1_i32_13, %c8_i32_11 : i32
    %27 = vector.broadcast %26 : i32 to vector<128x128xi32>
    %28 = arith.remsi %8, %27 : vector<128x128xi32>
    %c0_i32_14 = arith.constant 0 : i32
    %29 = vector.broadcast %c0_i32_14 : i32 to vector<128x128xi32>
    %30 = arith.cmpi ne, %28, %29 : vector<128x128xi32>
    %c0_i32_15 = arith.constant 0 : i32
    %31 = vector.broadcast %c0_i32_15 : i32 to vector<128x128xi32>
    %32 = arith.cmpi slt, %28, %31 : vector<128x128xi32>
    %c0_i32_16 = arith.constant 0 : i32
    %33 = arith.cmpi slt, %26, %c0_i32_16 : i32
    %34 = vector.broadcast %33 : i1 to vector<128x128xi1>
    %35 = vector.broadcast %34 : vector<128x128xi1> to vector<128x128xi1>
    %36 = arith.xori %32, %35 : vector<128x128xi1>
    %37 = arith.andi %36, %30 : vector<128x128xi1>
    %38 = vector.broadcast %26 : i32 to vector<128x128xi32>
    %39 = arith.addi %28, %38 : vector<128x128xi32>
    %40 = arith.select %37, %39, %28 : vector<128x128xi1>, vector<128x128xi32>
    %41 = arith.cmpi eq, %24, %40 : vector<128x128xi32>
    %42 = arith.extui %41 : vector<128x128xi1> to vector<128x128xi32>
    %43 = arith.sitofp %42 : vector<128x128xi32> to vector<128x128xf32>
    %cst_17 = arith.constant dense<0.000000e+00> : vector<16x128xf32>
    %44 = tpu.matmul %6, %43, %cst_17 {dimension_numbers = #tpu.dot_dimension_numbers<[1], [0], [0], [1], [0, 0, 1, 1], [], []>} : vector<16x128xf32>, vector<128x128xf32>, vector<16x128xf32> -> vector<16x128xf32>
    %cst_18 = arith.constant dense<0.000000e+00> : vector<128xf32>
    %45 = vector.multi_reduction <add>, %44, %cst_18 [0] : vector<16x128xf32> to vector<128xf32>
    %46 = vector.shape_cast %45 : vector<128xf32> to vector<1x128xf32>
    %cst_19 = arith.constant 3.906250e-03 : f32
    %47 = vector.broadcast %cst_19 : f32 to vector<1x128xf32>
    %48 = arith.mulf %46, %47 : vector<1x128xf32>
    %49 = vector.broadcast %48 : vector<1x128xf32> to vector<16x128xf32>
    %50 = arith.subf %6, %49 : vector<16x128xf32>
    %51 = arith.mulf %50, %50 : vector<16x128xf32>
    %52 = tpu.iota {dimensions = array<i32: 0>} : vector<128x128xi32>
    %53 = tpu.iota {dimensions = array<i32: 1>} : vector<128x128xi32>
    %c8_i32_20 = arith.constant 8 : i32
    %c0_i32_21 = arith.constant 0 : i32
    %54 = arith.cmpi eq, %c8_i32_20, %c0_i32_21 : i32
    %c1_i32_22 = arith.constant 1 : i32
    %55 = arith.select %54, %c1_i32_22, %c8_i32_20 : i32
    %56 = vector.broadcast %55 : i32 to vector<128x128xi32>
    %57 = arith.remsi %52, %56 : vector<128x128xi32>
    %c0_i32_23 = arith.constant 0 : i32
    %58 = vector.broadcast %c0_i32_23 : i32 to vector<128x128xi32>
    %59 = arith.cmpi ne, %57, %58 : vector<128x128xi32>
    %c0_i32_24 = arith.constant 0 : i32
    %60 = vector.broadcast %c0_i32_24 : i32 to vector<128x128xi32>
    %61 = arith.cmpi slt, %57, %60 : vector<128x128xi32>
    %c0_i32_25 = arith.constant 0 : i32
    %62 = arith.cmpi slt, %55, %c0_i32_25 : i32
    %63 = vector.broadcast %62 : i1 to vector<128x128xi1>
    %64 = vector.broadcast %63 : vector<128x128xi1> to vector<128x128xi1>
    %65 = arith.xori %61, %64 : vector<128x128xi1>
    %66 = arith.andi %65, %59 : vector<128x128xi1>
    %67 = vector.broadcast %55 : i32 to vector<128x128xi32>
    %68 = arith.addi %57, %67 : vector<128x128xi32>
    %69 = arith.select %66, %68, %57 : vector<128x128xi1>, vector<128x128xi32>
    %c8_i32_26 = arith.constant 8 : i32
    %c0_i32_27 = arith.constant 0 : i32
    %70 = arith.cmpi eq, %c8_i32_26, %c0_i32_27 : i32
    %c1_i32_28 = arith.constant 1 : i32
    %71 = arith.select %70, %c1_i32_28, %c8_i32_26 : i32
    %72 = vector.broadcast %71 : i32 to vector<128x128xi32>
    %73 = arith.remsi %53, %72 : vector<128x128xi32>
    %c0_i32_29 = arith.constant 0 : i32
    %74 = vector.broadcast %c0_i32_29 : i32 to vector<128x128xi32>
    %75 = arith.cmpi ne, %73, %74 : vector<128x128xi32>
    %c0_i32_30 = arith.constant 0 : i32
    %76 = vector.broadcast %c0_i32_30 : i32 to vector<128x128xi32>
    %77 = arith.cmpi slt, %73, %76 : vector<128x128xi32>
    %c0_i32_31 = arith.constant 0 : i32
    %78 = arith.cmpi slt, %71, %c0_i32_31 : i32
    %79 = vector.broadcast %78 : i1 to vector<128x128xi1>
    %80 = vector.broadcast %79 : vector<128x128xi1> to vector<128x128xi1>
    %81 = arith.xori %77, %80 : vector<128x128xi1>
    %82 = arith.andi %81, %75 : vector<128x128xi1>
    %83 = vector.broadcast %71 : i32 to vector<128x128xi32>
    %84 = arith.addi %73, %83 : vector<128x128xi32>
    %85 = arith.select %82, %84, %73 : vector<128x128xi1>, vector<128x128xi32>
    %86 = arith.cmpi eq, %69, %85 : vector<128x128xi32>
    %87 = arith.extui %86 : vector<128x128xi1> to vector<128x128xi32>
    %88 = arith.sitofp %87 : vector<128x128xi32> to vector<128x128xf32>
    %cst_32 = arith.constant dense<0.000000e+00> : vector<16x128xf32>
    %89 = tpu.matmul %51, %88, %cst_32 {dimension_numbers = #tpu.dot_dimension_numbers<[1], [0], [0], [1], [0, 0, 1, 1], [], []>} : vector<16x128xf32>, vector<128x128xf32>, vector<16x128xf32> -> vector<16x128xf32>
    %cst_33 = arith.constant dense<0.000000e+00> : vector<128xf32>
    %90 = vector.multi_reduction <add>, %89, %cst_33 [0] : vector<16x128xf32> to vector<128xf32>
    %91 = vector.shape_cast %90 : vector<128xf32> to vector<1x128xf32>
    %cst_34 = arith.constant 3.906250e-03 : f32
    %92 = vector.broadcast %cst_34 : f32 to vector<1x128xf32>
    %93 = arith.mulf %91, %92 : vector<1x128xf32>
    %c0_35 = arith.constant 0 : index
    %c0_36 = arith.constant 0 : index
    %94 = vector.load %arg9[%c0_35, %c0_36] : memref<1x128xf32, #tpu.memory_space<vmem>>, vector<1x128xf32>
    %cst_37 = arith.constant 9.99999974E-6 : f32
    %95 = vector.broadcast %cst_37 : f32 to vector<1x128xf32>
    %96 = arith.addf %93, %95 : vector<1x128xf32>
    %97 = math.rsqrt %96 : vector<1x128xf32>
    %98 = arith.mulf %94, %97 : vector<1x128xf32>
    %c0_38 = arith.constant 0 : index
    %c0_39 = arith.constant 0 : index
    %99 = vector.load %arg11[%c0_38, %c0_39] : memref<1x128xf32, #tpu.memory_space<vmem>>, vector<1x128xf32>
    %100 = arith.mulf %48, %98 : vector<1x128xf32>
    %101 = arith.subf %99, %100 : vector<1x128xf32>
    %102 = vector.broadcast %98 : vector<1x128xf32> to vector<16x128xf32>
    %103 = arith.mulf %6, %102 : vector<16x128xf32>
    %104 = vector.broadcast %101 : vector<1x128xf32> to vector<16x128xf32>
    %105 = arith.addf %103, %104 : vector<16x128xf32>
    %cst_40 = arith.constant 0.000000e+00 : f32
    %106 = vector.broadcast %cst_40 : f32 to vector<16x128xf32>
    %107 = arith.maximumf %105, %106 : vector<16x128xf32>
    %c0_41 = arith.constant 0 : index
    %c0_42 = arith.constant 0 : index
    %108 = vector.load %arg13[%c0_41, %c0_42] : memref<16x128xf32, #tpu.memory_space<vmem>>, vector<16x128xf32>
    tpu.vector_store %arg13[%c0_41, %c0_42], %107 {strides = array<i32>} : memref<16x128xf32, #tpu.memory_space<vmem>>, vector<16x128xf32>,
    %c0_43 = arith.constant 0 : index
    %c0_44 = arith.constant 0 : index
    %109 = vector.load %arg3[%c0_43, %c0_44] : memref<32x216xbf16, #tpu.memory_space<vmem>>, vector<32x216xbf16>
    %c0_45 = arith.constant 0 : index
    %c0_46 = arith.constant 0 : index
    %110 = vector.load %arg7[%c0_45, %c0_46] : memref<216x128xbf16, #tpu.memory_space<vmem>>, vector<216x128xbf16>
    %cst_47 = arith.constant dense<0.000000e+00> : vector<32x128xf32>
    %111 = tpu.matmul %109, %110, %cst_47 {dimension_numbers = #tpu.dot_dimension_numbers<[1], [0], [0], [1], [0, 0, 1, 1], [], []>} : vector<32x216xbf16>, vector<216x128xbf16>, vector<32x128xf32> -> vector<32x128xf32>
    %c0_48 = arith.constant 0 : index
    %c0_49 = arith.constant 0 : index
    %112 = vector.load %arg4[%c0_48, %c0_49] : memref<32x120xbf16, #tpu.memory_space<vmem>>, vector<32x120xbf16>
    %c0_50 = arith.constant 0 : index
    %c0_51 = arith.constant 0 : index
    %113 = vector.load %arg8[%c0_50, %c0_51] : memref<120x128xbf16, #tpu.memory_space<vmem>>, vector<120x128xbf16>
    %cst_52 = arith.constant dense<0.000000e+00> : vector<32x128xf32>
    %114 = tpu.matmul %112, %113, %cst_52 {dimension_numbers = #tpu.dot_dimension_numbers<[1], [0], [0], [1], [0, 0, 1, 1], [], []>} : vector<32x120xbf16>, vector<120x128xbf16>, vector<32x128xf32> -> vector<32x128xf32>
    %115 = arith.addf %111, %114 : vector<32x128xf32>
    %116 = tpu.iota {dimensions = array<i32: 0>} : vector<128x128xi32>
    %117 = tpu.iota {dimensions = array<i32: 1>} : vector<128x128xi32>
    %c8_i32_53 = arith.constant 8 : i32
    %c0_i32_54 = arith.constant 0 : i32
    %118 = arith.cmpi eq, %c8_i32_53, %c0_i32_54 : i32
    %c1_i32_55 = arith.constant 1 : i32
    %119 = arith.select %118, %c1_i32_55, %c8_i32_53 : i32
    %120 = vector.broadcast %119 : i32 to vector<128x128xi32>
    %121 = arith.remsi %116, %120 : vector<128x128xi32>
    %c0_i32_56 = arith.constant 0 : i32
    %122 = vector.broadcast %c0_i32_56 : i32 to vector<128x128xi32>
    %123 = arith.cmpi ne, %121, %122 : vector<128x128xi32>
    %c0_i32_57 = arith.constant 0 : i32
    %124 = vector.broadcast %c0_i32_57 : i32 to vector<128x128xi32>
    %125 = arith.cmpi slt, %121, %124 : vector<128x128xi32>
    %c0_i32_58 = arith.constant 0 : i32
    %126 = arith.cmpi slt, %119, %c0_i32_58 : i32
    %127 = vector.broadcast %126 : i1 to vector<128x128xi1>
    %128 = vector.broadcast %127 : vector<128x128xi1> to vector<128x128xi1>
    %129 = arith.xori %125, %128 : vector<128x128xi1>
    %130 = arith.andi %129, %123 : vector<128x128xi1>
    %131 = vector.broadcast %119 : i32 to vector<128x128xi32>
    %132 = arith.addi %121, %131 : vector<128x128xi32>
    %133 = arith.select %130, %132, %121 : vector<128x128xi1>, vector<128x128xi32>
    %c8_i32_59 = arith.constant 8 : i32
    %c0_i32_60 = arith.constant 0 : i32
    %134 = arith.cmpi eq, %c8_i32_59, %c0_i32_60 : i32
    %c1_i32_61 = arith.constant 1 : i32
    %135 = arith.select %134, %c1_i32_61, %c8_i32_59 : i32
    %136 = vector.broadcast %135 : i32 to vector<128x128xi32>
    %137 = arith.remsi %117, %136 : vector<128x128xi32>
    %c0_i32_62 = arith.constant 0 : i32
    %138 = vector.broadcast %c0_i32_62 : i32 to vector<128x128xi32>
    %139 = arith.cmpi ne, %137, %138 : vector<128x128xi32>
    %c0_i32_63 = arith.constant 0 : i32
    %140 = vector.broadcast %c0_i32_63 : i32 to vector<128x128xi32>
    %141 = arith.cmpi slt, %137, %140 : vector<128x128xi32>
    %c0_i32_64 = arith.constant 0 : i32
    %142 = arith.cmpi slt, %135, %c0_i32_64 : i32
    %143 = vector.broadcast %142 : i1 to vector<128x128xi1>
    %144 = vector.broadcast %143 : vector<128x128xi1> to vector<128x128xi1>
    %145 = arith.xori %141, %144 : vector<128x128xi1>
    %146 = arith.andi %145, %139 : vector<128x128xi1>
    %147 = vector.broadcast %135 : i32 to vector<128x128xi32>
    %148 = arith.addi %137, %147 : vector<128x128xi32>
    %149 = arith.select %146, %148, %137 : vector<128x128xi1>, vector<128x128xi32>
    %150 = arith.cmpi eq, %133, %149 : vector<128x128xi32>
    %151 = arith.extui %150 : vector<128x128xi1> to vector<128x128xi32>
    %152 = arith.sitofp %151 : vector<128x128xi32> to vector<128x128xf32>
    %cst_65 = arith.constant dense<0.000000e+00> : vector<32x128xf32>
    %153 = tpu.matmul %115, %152, %cst_65 {dimension_numbers = #tpu.dot_dimension_numbers<[1], [0], [0], [1], [0, 0, 1, 1], [], []>} : vector<32x128xf32>, vector<128x128xf32>, vector<32x128xf32> -> vector<32x128xf32>
    %cst_66 = arith.constant dense<0.000000e+00> : vector<128xf32>
    %154 = vector.multi_reduction <add>, %153, %cst_66 [0] : vector<32x128xf32> to vector<128xf32>
    %155 = vector.shape_cast %154 : vector<128xf32> to vector<1x128xf32>
    %cst_67 = arith.constant 0.001953125 : f32
    %156 = vector.broadcast %cst_67 : f32 to vector<1x128xf32>
    %157 = arith.mulf %155, %156 : vector<1x128xf32>
    %158 = vector.broadcast %157 : vector<1x128xf32> to vector<32x128xf32>
    %159 = arith.subf %115, %158 : vector<32x128xf32>
    %160 = arith.mulf %159, %159 : vector<32x128xf32>
    %161 = tpu.iota {dimensions = array<i32: 0>} : vector<128x128xi32>
    %162 = tpu.iota {dimensions = array<i32: 1>} : vector<128x128xi32>
    %c8_i32_68 = arith.constant 8 : i32
    %c0_i32_69 = arith.constant 0 : i32
    %163 = arith.cmpi eq, %c8_i32_68, %c0_i32_69 : i32
    %c1_i32_70 = arith.constant 1 : i32
    %164 = arith.select %163, %c1_i32_70, %c8_i32_68 : i32
    %165 = vector.broadcast %164 : i32 to vector<128x128xi32>
    %166 = arith.remsi %161, %165 : vector<128x128xi32>
    %c0_i32_71 = arith.constant 0 : i32
    %167 = vector.broadcast %c0_i32_71 : i32 to vector<128x128xi32>
    %168 = arith.cmpi ne, %166, %167 : vector<128x128xi32>
    %c0_i32_72 = arith.constant 0 : i32
    %169 = vector.broadcast %c0_i32_72 : i32 to vector<128x128xi32>
    %170 = arith.cmpi slt, %166, %169 : vector<128x128xi32>
    %c0_i32_73 = arith.constant 0 : i32
    %171 = arith.cmpi slt, %164, %c0_i32_73 : i32
    %172 = vector.broadcast %171 : i1 to vector<128x128xi1>
    %173 = vector.broadcast %172 : vector<128x128xi1> to vector<128x128xi1>
    %174 = arith.xori %170, %173 : vector<128x128xi1>
    %175 = arith.andi %174, %168 : vector<128x128xi1>
    %176 = vector.broadcast %164 : i32 to vector<128x128xi32>
    %177 = arith.addi %166, %176 : vector<128x128xi32>
    %178 = arith.select %175, %177, %166 : vector<128x128xi1>, vector<128x128xi32>
    %c8_i32_74 = arith.constant 8 : i32
    %c0_i32_75 = arith.constant 0 : i32
    %179 = arith.cmpi eq, %c8_i32_74, %c0_i32_75 : i32
    %c1_i32_76 = arith.constant 1 : i32
    %180 = arith.select %179, %c1_i32_76, %c8_i32_74 : i32
    %181 = vector.broadcast %180 : i32 to vector<128x128xi32>
    %182 = arith.remsi %162, %181 : vector<128x128xi32>
    %c0_i32_77 = arith.constant 0 : i32
    %183 = vector.broadcast %c0_i32_77 : i32 to vector<128x128xi32>
    %184 = arith.cmpi ne, %182, %183 : vector<128x128xi32>
    %c0_i32_78 = arith.constant 0 : i32
    %185 = vector.broadcast %c0_i32_78 : i32 to vector<128x128xi32>
    %186 = arith.cmpi slt, %182, %185 : vector<128x128xi32>
    %c0_i32_79 = arith.constant 0 : i32
    %187 = arith.cmpi slt, %180, %c0_i32_79 : i32
    %188 = vector.broadcast %187 : i1 to vector<128x128xi1>
    %189 = vector.broadcast %188 : vector<128x128xi1> to vector<128x128xi1>
    %190 = arith.xori %186, %189 : vector<128x128xi1>
    %191 = arith.andi %190, %184 : vector<128x128xi1>
    %192 = vector.broadcast %180 : i32 to vector<128x128xi32>
    %193 = arith.addi %182, %192 : vector<128x128xi32>
    %194 = arith.select %191, %193, %182 : vector<128x128xi1>, vector<128x128xi32>
    %195 = arith.cmpi eq, %178, %194 : vector<128x128xi32>
    %196 = arith.extui %195 : vector<128x128xi1> to vector<128x128xi32>
    %197 = arith.sitofp %196 : vector<128x128xi32> to vector<128x128xf32>
    %cst_80 = arith.constant dense<0.000000e+00> : vector<32x128xf32>
    %198 = tpu.matmul %160, %197, %cst_80 {dimension_numbers = #tpu.dot_dimension_numbers<[1], [0], [0], [1], [0, 0, 1, 1], [], []>} : vector<32x128xf32>, vector<128x128xf32>, vector<32x128xf32> -> vector<32x128xf32>
    %cst_81 = arith.constant dense<0.000000e+00> : vector<128xf32>
    %199 = vector.multi_reduction <add>, %198, %cst_81 [0] : vector<32x128xf32> to vector<128xf32>
    %200 = vector.shape_cast %199 : vector<128xf32> to vector<1x128xf32>
    %cst_82 = arith.constant 0.001953125 : f32
    %201 = vector.broadcast %cst_82 : f32 to vector<1x128xf32>
    %202 = arith.mulf %200, %201 : vector<1x128xf32>
    %c0_83 = arith.constant 0 : index
    %c0_84 = arith.constant 0 : index
    %203 = vector.load %arg10[%c0_83, %c0_84] : memref<1x128xf32, #tpu.memory_space<vmem>>, vector<1x128xf32>
    %cst_85 = arith.constant 9.99999974E-6 : f32
    %204 = vector.broadcast %cst_85 : f32 to vector<1x128xf32>
    %205 = arith.addf %202, %204 : vector<1x128xf32>
    %206 = math.rsqrt %205 : vector<1x128xf32>
    %207 = arith.mulf %203, %206 : vector<1x128xf32>
    %c0_86 = arith.constant 0 : index
    %c0_87 = arith.constant 0 : index
    %208 = vector.load %arg12[%c0_86, %c0_87] : memref<1x128xf32, #tpu.memory_space<vmem>>, vector<1x128xf32>
    %209 = arith.mulf %157, %207 : vector<1x128xf32>
    %210 = arith.subf %208, %209 : vector<1x128xf32>
    %211 = vector.broadcast %207 : vector<1x128xf32> to vector<32x128xf32>
    %212 = arith.mulf %115, %211 : vector<32x128xf32>
    %213 = vector.broadcast %210 : vector<1x128xf32> to vector<32x128xf32>
    %214 = arith.addf %212, %213 : vector<32x128xf32>
    %cst_88 = arith.constant 0.000000e+00 : f32
    %215 = vector.broadcast %cst_88 : f32 to vector<32x128xf32>
    %216 = arith.maximumf %214, %215 : vector<32x128xf32>
    %c0_89 = arith.constant 0 : index
    %c0_90 = arith.constant 0 : index
    %217 = vector.load %arg14[%c0_89, %c0_90] : memref<32x128xf32, #tpu.memory_space<vmem>>, vector<32x128xf32>
    tpu.vector_store %arg14[%c0_89, %c0_90], %216 {strides = array<i32>} : memref<32x128xf32, #tpu.memory_space<vmem>>, vector<32x128xf32>,
    return
  }
  func.func @transform_0(%arg0: i32) -> (i32, i32) {
    %c0_i32 = arith.constant 0 : i32
    %c0_i32_0 = arith.constant 0 : i32
    %c0_i32_1 = arith.constant 0 : i32
    return %c0_i32, %c0_i32_0 : i32, i32
  }
  func.func @transform_1(%arg0: i32) -> (i32, i32) {
    %c0_i32 = arith.constant 0 : i32
    %c0_i32_0 = arith.constant 0 : i32
    %c0_i32_1 = arith.constant 0 : i32
    return %c0_i32, %c0_i32_0 : i32, i32
  }
  func.func @transform_2(%arg0: i32) -> (i32, i32) {
    %c0_i32 = arith.constant 0 : i32
    %c0_i32_0 = arith.constant 0 : i32
    %c0_i32_1 = arith.constant 0 : i32
    return %c0_i32, %c0_i32_0 : i32, i32
  }
  func.func @transform_3(%arg0: i32) -> (i32, i32) {
    %c0_i32 = arith.constant 0 : i32
    %c0_i32_0 = arith.constant 0 : i32
    %c0_i32_1 = arith.constant 0 : i32
    return %c0_i32, %c0_i32_0 : i32, i32
  }
  func.func @transform_4(%arg0: i32) -> (i32, i32) {
    %c0_i32 = arith.constant 0 : i32
    %c0_i32_0 = arith.constant 0 : i32
    %c0_i32_1 = arith.constant 0 : i32
    return %c0_i32, %c0_i32_0 : i32, i32
  }
  func.func @transform_5(%arg0: i32) -> (i32, i32) {
    %c0_i32 = arith.constant 0 : i32
    %c0_i32_0 = arith.constant 0 : i32
    %c0_i32_1 = arith.constant 0 : i32
    return %c0_i32, %c0_i32_0 : i32, i32
  }
  func.func @transform_6(%arg0: i32) -> (i32, i32) {
    %c0_i32 = arith.constant 0 : i32
    %c0_i32_0 = arith.constant 0 : i32
    %c0_i32_1 = arith.constant 0 : i32
    return %c0_i32, %c0_i32_0 : i32, i32
  }
  func.func @transform_7(%arg0: i32) -> (i32, i32) {
    %c0_i32 = arith.constant 0 : i32
    %c0_i32_0 = arith.constant 0 : i32
    %c0_i32_1 = arith.constant 0 : i32
    return %c0_i32, %c0_i32_0 : i32, i32
  }
  func.func @transform_8(%arg0: i32) -> (i32, i32) {
    %c0_i32 = arith.constant 0 : i32
    %c0_i32_0 = arith.constant 0 : i32
    %c0_i32_1 = arith.constant 0 : i32
    return %c0_i32, %c0_i32_0 : i32, i32
  }
  func.func @transform_9(%arg0: i32) -> (i32, i32) {
    %c0_i32 = arith.constant 0 : i32
    %c0_i32_0 = arith.constant 0 : i32
    %c0_i32_1 = arith.constant 0 : i32
    return %c0_i32, %c0_i32_0 : i32, i32
  }
  func.func @transform_10(%arg0: i32) -> (i32, i32) {
    %c0_i32 = arith.constant 0 : i32
    %c0_i32_0 = arith.constant 0 : i32
    %c0_i32_1 = arith.constant 0 : i32
    return %c0_i32, %c0_i32_0 : i32, i32
  }
  func.func @transform_11(%arg0: i32) -> (i32, i32) {
    %c0_i32 = arith.constant 0 : i32
    %c0_i32_0 = arith.constant 0 : i32
    %c0_i32_1 = arith.constant 0 : i32
    return %c0_i32, %c0_i32_0 : i32, i32
  }
  func.func @transform_12(%arg0: i32) -> (i32, i32) {
    %c0_i32 = arith.constant 0 : i32
    %c0_i32_0 = arith.constant 0 : i32
    %c0_i32_1 = arith.constant 0 : i32
    return %c0_i32, %c0_i32_0 : i32, i32
  }
  func.func @transform_13(%arg0: i32) -> (i32, i32) {
    %c0_i32 = arith.constant 0 : i32
    %c0_i32_0 = arith.constant 0 : i32
    %c0_i32_1 = arith.constant 0 : i32
    return %c0_i32, %c0_i32_0 : i32, i32
  }
}

</mosaic_0001>

<llo_original>
// kernel: tile.23
$region0: #{tile.23}
  #allocation0 [shape = 's32[1]{0}', space=sflag, size = 0x4, scoped, tag = 'scoped memory for tile.23']
  %s0 = inlined_call_operand.vmem [shape: f32[8], index: 0, kind: input, shape index: {}]
  %s1 = inlined_call_operand.vmem [shape: f32[16,8], index: 1, kind: output, shape index: {}]
  // Predicated region
  $region2: #{tile.23} parent=0 // pred_check
    _
  $region3: #{tile.23} parent=0 // pred_check_branch
    %3 = sbr.rel (0) target = $region5
  $region4: #{tile.23} parent=0 // pred_region
    _
  $region5: #{tile.23} parent=0 // pred_fallthru
    _
  %v4 = vld [vmem:[%s0] ss:$0 sm:$0xff]
  %5 = vst [vmem:[%s1] sm:$0xff] %v4
  %s6 = scalar_lea.vmem %s1, 8
  %7 = vst [vmem:[%s6] sm:$0xff] %v4

// kernel: tile.24
$region0: #{tile.24}
  %s0 = inlined_call_operand.vmem [shape: f32[16,8], index: 0, kind: input, shape index: {}]
  %s1 = inlined_call_operand.vmem [shape: f32[1,128], index: 1, kind: output, shape index: {}]
  $region1: #{tile.24} parent=0
    #allocation0 [shape = 'u8[4096]{0}', space=vmem, size = 0x1000, scoped, tag = 'scoped mem for output reshape']
    %v2 = vld [vmem:[%s0] sm:$0x1]
    %vm3 = vcmask 64512
    %4 = vst.msk [vmem:[#allocation0] sm:$0x1] %vm3, %v2
    %s5 = scalar_lea.vmem %s0, 15
    %v6 = vld [vmem:[%s5] sm:$0x1]
    %7 = vrot.lane.b32.xlu0 %v6, 120
    %v8 = vpop.permute.xlu0 %7
    %vm9 = vcmask 1048512
    %10 = vst.msk [vmem:[#allocation0] sm:$0x1] %vm9, %v8
    %s11 = scalar_lea.vmem %s0, 14
    %v12 = vld [vmem:[%s11] sm:$0x1]
    %13 = vrot.lane.b32.xlu0 %v12, 112
    %v14 = vpop.permute.xlu0 %13
    %vm15 = vcmask 982912
    %16 = vst.msk [vmem:[#allocation0] sm:$0x1] %vm15, %v14
    %s17 = scalar_lea.vmem %s0, 13
    %v18 = vld [vmem:[%s17] sm:$0x1]
    %19 = vrot.lane.b32.xlu0 %v18, 104
    %v20 = vpop.permute.xlu0 %19
    %vm21 = vcmask 917312
    %22 = vst.msk [vmem:[#allocation0] sm:$0x1] %vm21, %v20
    %s23 = scalar_lea.vmem %s0, 12
    %v24 = vld [vmem:[%s23] sm:$0x1]
    %25 = vrot.lane.b32.xlu0 %v24, 96
    %v26 = vpop.permute.xlu0 %25
    %vm27 = vcmask 851712
    %28 = vst.msk [vmem:[#allocation0] sm:$0x1] %vm27, %v26
    %s29 = scalar_lea.vmem %s0, 11
    %v30 = vld [vmem:[%s29] sm:$0x1]
    %31 = vrot.lane.b32.xlu0 %v30, 88
    %v32 = vpop.permute.xlu0 %31
    %vm33 = vcmask 786112
    %34 = vst.msk [vmem:[#allocation0] sm:$0x1] %vm33, %v32
    %s35 = scalar_lea.vmem %s0, 10
    %v36 = vld [vmem:[%s35] sm:$0x1]
    %37 = vrot.lane.b32.xlu0 %v36, 80
    %v38 = vpop.permute.xlu0 %37
    %vm39 = vcmask 720512
    %40 = vst.msk [vmem:[#allocation0] sm:$0x1] %vm39, %v38
    %s41 = scalar_lea.vmem %s0, 9
    %v42 = vld [vmem:[%s41] sm:$0x1]
    %43 = vrot.lane.b32.xlu0 %v42, 72
    %v44 = vpop.permute.xlu0 %43
    %vm45 = vcmask 654912
    %46 = vst.msk [vmem:[#allocation0] sm:$0x1] %vm45, %v44
    %s47 = scalar_lea.vmem %s0, 8
    %v48 = vld [vmem:[%s47] sm:$0x1]
    %49 = vrot.lane.b32.xlu0 %v48, 64
    %v50 = vpop.permute.xlu0 %49
    %vm51 = vcmask 589312
    %52 = vst.msk [vmem:[#allocation0] sm:$0x1] %vm51, %v50
    %s53 = scalar_lea.vmem %s0, 7
    %v54 = vld [vmem:[%s53] sm:$0x1]
    %55 = vrot.lane.b32.xlu0 %v54, 56
    %v56 = vpop.permute.xlu0 %55
    %vm57 = vcmask 523712
    %58 = vst.msk [vmem:[#allocation0] sm:$0x1] %vm57, %v56
    %s59 = scalar_lea.vmem %s0, 6
    %v60 = vld [vmem:[%s59] sm:$0x1]
    %61 = vrot.lane.b32.xlu0 %v60, 48
    %v62 = vpop.permute.xlu0 %61
    %vm63 = vcmask 458112
    %64 = vst.msk [vmem:[#allocation0] sm:$0x1] %vm63, %v62
    %s65 = scalar_lea.vmem %s0, 5
    %v66 = vld [vmem:[%s65] sm:$0x1]
    %67 = vrot.lane.b32.xlu0 %v66, 40
    %v68 = vpop.permute.xlu0 %67
    %vm69 = vcmask 392512
    %70 = vst.msk [vmem:[#allocation0] sm:$0x1] %vm69, %v68
    %s71 = scalar_lea.vmem %s0, 4
    %v72 = vld [vmem:[%s71] sm:$0x1]
    %73 = vrot.lane.b32.xlu0 %v72, 32
    %v74 = vpop.permute.xlu0 %73
    %vm75 = vcmask 326912
    %76 = vst.msk [vmem:[#allocation0] sm:$0x1] %vm75, %v74
    %s77 = scalar_lea.vmem %s0, 3
    %v78 = vld [vmem:[%s77] sm:$0x1]
    %79 = vrot.lane.b32.xlu0 %v78, 24
    %v80 = vpop.permute.xlu0 %79
    %vm81 = vcmask 261312
    %82 = vst.msk [vmem:[#allocation0] sm:$0x1] %vm81, %v80
    %s83 = scalar_lea.vmem %s0, 2
    %v84 = vld [vmem:[%s83] sm:$0x1]
    %85 = vrot.lane.b32.xlu0 %v84, 16
    %v86 = vpop.permute.xlu0 %85
    %vm87 = vcmask 195712
    %88 = vst.msk [vmem:[#allocation0] sm:$0x1] %vm87, %v86
    %s89 = scalar_lea.vmem %s0, 1
    %v90 = vld [vmem:[%s89] sm:$0x1]
    %91 = vrot.lane.b32.xlu0 %v90, 8
    %v92 = vpop.permute.xlu0 %91
    %vm93 = vcmask 130112
    %94 = vst.msk [vmem:[#allocation0] sm:$0x1] %vm93, %v92
    %s96 = sshllo.u32 0, 1
    %v98 = vld [vmem:[#allocation0] sm:%s96]
    %s99 = sshllo.u32 0, 1
    %100 = vst [vmem:[%s1] sm:%s99] %v98

// kernel: forward.1
$region0: #{forward.1}
  #allocation0 [shape = 'u32[]', space=smem, size = 0x4, offset = 0x4, fixed_abs, tag = 'smem constant byte address 0x4 - core index']
  #allocation1 [shape = 'u32[144,128]{1,0:T(1,128)}', space=vmem, size = 0x12000, scoped, tag = 'internal scratch']
  %s0 = inlined_call_operand.vmem [shape: bf16[16,120], index: 0, kind: input, shape index: {}]
  %s1 = inlined_call_operand.vmem [shape: bf16[16,120], index: 1, kind: input, shape index: {}]
  %s2 = inlined_call_operand.vmem [shape: bf16[32,216], index: 2, kind: input, shape index: {}]
  %s3 = inlined_call_operand.vmem [shape: bf16[32,120], index: 3, kind: input, shape index: {}]
  %s4 = inlined_call_operand.vmem [shape: bf16[120,128], index: 4, kind: input, shape index: {}]
  %s5 = inlined_call_operand.vmem [shape: bf16[120,128], index: 5, kind: input, shape index: {}]
  %s6 = inlined_call_operand.vmem [shape: bf16[216,128], index: 6, kind: input, shape index: {}]
  %s7 = inlined_call_operand.vmem [shape: bf16[120,128], index: 7, kind: input, shape index: {}]
  %s8 = inlined_call_operand.vmem [shape: f32[1,128], index: 8, kind: input, shape index: {}]
  %s9 = inlined_call_operand.vmem [shape: f32[1,128], index: 9, kind: input, shape index: {}]
  %s10 = inlined_call_operand.vmem [shape: f32[1,128], index: 10, kind: input, shape index: {}]
  %s11 = inlined_call_operand.vmem [shape: f32[1,128], index: 11, kind: input, shape index: {}]
  %s12 = inlined_call_operand.vmem [shape: f32[16,128], index: 12, kind: output, shape index: {0}]
  %s13 = inlined_call_operand.vmem [shape: f32[32,128], index: 13, kind: output, shape index: {1}]
  %14 = xla_tuple %s12, %s13
  %s15 = sld [smem:[#allocation0]]
  $region66: #{forward.1} parent=0
    _
  %s17 = ssub.s32 1, %s15
  %s18 = scalar_select 0, %s17, %s15
  // Predicated region
  $region2: #{forward.1} parent=0 // pred_check
    _
  $region3: #{forward.1} parent=0 // pred_check_branch
    %20 = sbr.rel (0) target = $region5
  $region4: #{forward.1} parent=0 // pred_region
    _
  $region5: #{forward.1} parent=0 // pred_fallthru
    _
  // Predicated region
  $region6: #{forward.1} parent=0 // pred_check
    _
  $region7: #{forward.1} parent=0 // pred_check_branch
    %22 = sbr.rel (0) target = $region9
  $region8: #{forward.1} parent=0 // pred_region
    _
  $region9: #{forward.1} parent=0 // pred_fallthru
    _
  // Predicated region
  $region10: #{forward.1} parent=0 // pred_check
    _
  $region11: #{forward.1} parent=0 // pred_check_branch
    %24 = sbr.rel (0) target = $region13
  $region12: #{forward.1} parent=0 // pred_region
    _
  $region13: #{forward.1} parent=0 // pred_fallthru
    _
  // Predicated region
  $region14: #{forward.1} parent=0 // pred_check
    _
  $region15: #{forward.1} parent=0 // pred_check_branch
    %26 = sbr.rel (0) target = $region17
  $region16: #{forward.1} parent=0 // pred_region
    _
  $region17: #{forward.1} parent=0 // pred_fallthru
    _
  // Predicated region
  $region18: #{forward.1} parent=0 // pred_check
    _
  $region19: #{forward.1} parent=0 // pred_check_branch
    %28 = sbr.rel (0) target = $region21
  $region20: #{forward.1} parent=0 // pred_region
    _
  $region21: #{forward.1} parent=0 // pred_fallthru
    _
  // Predicated region
  $region22: #{forward.1} parent=0 // pred_check
    _
  $region23: #{forward.1} parent=0 // pred_check_branch
    %30 = sbr.rel (0) target = $region25
  $region24: #{forward.1} parent=0 // pred_region
    _
  $region25: #{forward.1} parent=0 // pred_fallthru
    _
  // Predicated region
  $region26: #{forward.1} parent=0 // pred_check
    _
  $region27: #{forward.1} parent=0 // pred_check_branch
    %32 = sbr.rel (0) target = $region29
  $region28: #{forward.1} parent=0 // pred_region
    _
  $region29: #{forward.1} parent=0 // pred_fallthru
    _
  // Predicated region
  $region30: #{forward.1} parent=0 // pred_check
    _
  $region31: #{forward.1} parent=0 // pred_check_branch
    %34 = sbr.rel (0) target = $region33
  $region32: #{forward.1} parent=0 // pred_region
    _
  $region33: #{forward.1} parent=0 // pred_fallthru
    _
  // Predicated region
  $region34: #{forward.1} parent=0 // pred_check
    _
  $region35: #{forward.1} parent=0 // pred_check_branch
    %36 = sbr.rel (0) target = $region37
  $region36: #{forward.1} parent=0 // pred_region
    _
  $region37: #{forward.1} parent=0 // pred_fallthru
    _
  // Predicated region
  $region38: #{forward.1} parent=0 // pred_check
    _
  $region39: #{forward.1} parent=0 // pred_check_branch
    %38 = sbr.rel (0) target = $region41
  $region40: #{forward.1} parent=0 // pred_region
    _
  $region41: #{forward.1} parent=0 // pred_fallthru
    _
  // Predicated region
  $region42: #{forward.1} parent=0 // pred_check
    _
  $region43: #{forward.1} parent=0 // pred_check_branch
    %40 = sbr.rel (0) target = $region45
  $region44: #{forward.1} parent=0 // pred_region
    _
  $region45: #{forward.1} parent=0 // pred_fallthru
    _
  // Predicated region
  $region46: #{forward.1} parent=0 // pred_check
    _
  $region47: #{forward.1} parent=0 // pred_check_branch
    %42 = sbr.rel (0) target = $region49
  $region48: #{forward.1} parent=0 // pred_region
    _
  $region49: #{forward.1} parent=0 // pred_fallthru
    _
  %v44 = vld [vmem:[%s0] sm:$0xf]
  %v45 = vld [vmem:[%s0 + $0x4] sm:$0xf]
  %v46 = vld [vmem:[%s4] sm:$0xf]
  %v47 = vld [vmem:[%s4 + $0x4] sm:$0xf]
  %v48 = vld [vmem:[%s4 + $0x8] sm:$0xf]
  %v49 = vld [vmem:[%s4 + $0xc] sm:$0xf]
  %v50 = vld [vmem:[%s4 + $0x10] sm:$0xf]
  %v51 = vld [vmem:[%s4 + $0x14] sm:$0xf]
  %v52 = vld [vmem:[%s4 + $0x18] sm:$0xf]
  %v53 = vld [vmem:[%s4 + $0x1c] sm:$0xf]
  %v54 = vld [vmem:[%s4 + $0x20] sm:$0xf]
  %v55 = vld [vmem:[%s4 + $0x24] sm:$0xf]
  %v56 = vld [vmem:[%s4 + $0x28] sm:$0xf]
  %v57 = vld [vmem:[%s4 + $0x2c] sm:$0xf]
  %v58 = vld [vmem:[%s4 + $0x30] sm:$0xf]
  %v59 = vld [vmem:[%s4 + $0x34] sm:$0xf]
  %v60 = vld [vmem:[%s4 + $0x38] sm:$0xf]
  %v61 = vld [vmem:[%s1] sm:$0xf]
  %v62 = vld [vmem:[%s1 + $0x4] sm:$0xf]
  %v63 = vld [vmem:[%s5] sm:$0xf]
  %v64 = vld [vmem:[%s5 + $0x4] sm:$0xf]
  %v65 = vld [vmem:[%s5 + $0x8] sm:$0xf]
  %v66 = vld [vmem:[%s5 + $0xc] sm:$0xf]
  %v67 = vld [vmem:[%s5 + $0x10] sm:$0xf]
  %v68 = vld [vmem:[%s5 + $0x14] sm:$0xf]
  %v69 = vld [vmem:[%s5 + $0x18] sm:$0xf]
  %v70 = vld [vmem:[%s5 + $0x1c] sm:$0xf]
  %v71 = vld [vmem:[%s5 + $0x20] sm:$0xf]
  %v72 = vld [vmem:[%s5 + $0x24] sm:$0xf]
  %v73 = vld [vmem:[%s5 + $0x28] sm:$0xf]
  %v74 = vld [vmem:[%s5 + $0x2c] sm:$0xf]
  %v75 = vld [vmem:[%s5 + $0x30] sm:$0xf]
  %v76 = vld [vmem:[%s5 + $0x34] sm:$0xf]
  %v77 = vld [vmem:[%s5 + $0x38] sm:$0xf]
  %v80 = vunpack.c.l.b16 %v61
  %v81 = vunpack.c.l.b16 %v62
  %v82 = vpack.c.b16 %v81, %v80
  %v98 = vunpack.c.l.b16 %v63
  %v99 = vunpack.c.l.b16 %v64
  %v100 = vunpack.c.l.b16 %v65
  %v101 = vunpack.c.l.b16 %v66
  %v102 = vunpack.c.l.b16 %v67
  %v103 = vunpack.c.l.b16 %v68
  %v104 = vunpack.c.l.b16 %v69
  %v105 = vunpack.c.l.b16 %v70
  %v106 = vunpack.c.l.b16 %v71
  %v107 = vunpack.c.l.b16 %v72
  %v108 = vunpack.c.l.b16 %v73
  %v109 = vunpack.c.l.b16 %v74
  %v110 = vunpack.c.l.b16 %v75
  %v111 = vunpack.c.l.b16 %v76
  %v112 = vunpack.c.l.b16 %v77
  %v113 = vpack.c.b16 %v99, %v98
  %v114 = vpack.c.b16 %v101, %v100
  %v115 = vpack.c.b16 %v103, %v102
  %v116 = vpack.c.b16 %v105, %v104
  %v117 = vpack.c.b16 %v107, %v106
  %v118 = vpack.c.b16 %v109, %v108
  %v119 = vpack.c.b16 %v111, %v110
  %v120 = vpack.c.b16 %v112, %v112
  %vm128 = vcmask 982016
  %v130 = vsel %vm128, %v82, 0
  %vm132 = vcmask 1043456
  %v134 = vsel %vm132, %v120, 0
  %136 = vmatprep.subr.bf16.mxu0 0
  %137 = vmatpush1.bf16.msra.mxu0 %v113
  %138 = vmatprep.subr.bf16.mxu0 0
  %139 = vmatpush1.bf16.msra.mxu0 %v114
  %140 = vmatprep.subr.bf16.mxu0 0
  %141 = vmatpush1.bf16.msra.mxu0 %v115
  %142 = vmatprep.subr.bf16.mxu0 0
  %143 = vmatpush1.bf16.msra.mxu0 %v116
  %144 = vmatprep.subr.bf16.mxu0 0
  %145 = vmatpush1.bf16.msra.mxu0 %v117
  %146 = vmatprep.subr.bf16.mxu0 0
  %147 = vmatpush1.bf16.msra.mxu0 %v118
  %148 = vmatprep.subr.bf16.mxu0 0
  %149 = vmatpush1.bf16.msra.mxu0 %v119
  %150 = vmatprep.subr.bf16.mxu0 0
  %151 = vmatpush1.bf16.msra.mxu0 %v134
  %152 = vmatprep.subr.bf16.mxu0 0
  %153 = vmatpush1.bf16.msra.mxu0 0
  %154 = vmatprep.subr.bf16.mxu0 0
  %155 = vmatpush1.bf16.msra.mxu0 0
  %156 = vmatprep.subr.bf16.mxu0 0
  %157 = vmatpush1.bf16.msra.mxu0 0
  %158 = vmatprep.subr.bf16.mxu0 0
  %159 = vmatpush1.bf16.msra.mxu0 0
  %160 = vmatprep.subr.bf16.mxu0 0
  %161 = vmatpush1.bf16.msra.mxu0 0
  %162 = vmatprep.subr.bf16.mxu0 0
  %163 = vmatpush1.bf16.msra.mxu0 0
  %164 = vmatprep.subr.bf16.mxu0 0
  %165 = vmatpush1.bf16.msra.mxu0 0
  %166 = vmatprep.subr.bf16.mxu0 0
  %167 = vmatpush1.bf16.msra.mxu0 0
  %168 = vmatprep.mubr.bf16.mxu0 0
  %169 = vmatmul.mubr.bf16.gmra.mrb[0].mxu0 %v130
  %v170 = vpop.f32.mrb[0].mxu0
  %v171 = vadd.f32 0.0, %v170
  %v172 = vpop.f32.mrb[0].mxu0
  %v173 = vpop.f32.mrb[0].mxu0
  %v174 = vadd.f32 0.0, %v173
  %v175 = vpop.f32.mrb[0].mxu0
  %176 = vdwg.mxu0
  %v179 = vunpack.c.l.b16 %v44
  %v180 = vunpack.c.l.b16 %v45
  %v181 = vpack.c.b16 %v180, %v179
  %v197 = vunpack.c.l.b16 %v46
  %v198 = vunpack.c.l.b16 %v47
  %v199 = vunpack.c.l.b16 %v48
  %v200 = vunpack.c.l.b16 %v49
  %v201 = vunpack.c.l.b16 %v50
  %v202 = vunpack.c.l.b16 %v51
  %v203 = vunpack.c.l.b16 %v52
  %v204 = vunpack.c.l.b16 %v53
  %v205 = vunpack.c.l.b16 %v54
  %v206 = vunpack.c.l.b16 %v55
  %v207 = vunpack.c.l.b16 %v56
  %v208 = vunpack.c.l.b16 %v57
  %v209 = vunpack.c.l.b16 %v58
  %v210 = vunpack.c.l.b16 %v59
  %v211 = vunpack.c.l.b16 %v60
  %v212 = vpack.c.b16 %v198, %v197
  %v213 = vpack.c.b16 %v200, %v199
  %v214 = vpack.c.b16 %v202, %v201
  %v215 = vpack.c.b16 %v204, %v203
  %v216 = vpack.c.b16 %v206, %v205
  %v217 = vpack.c.b16 %v208, %v207
  %v218 = vpack.c.b16 %v210, %v209
  %v219 = vpack.c.b16 %v211, %v211
  %v228 = vsel %vm128, %v181, 0
  %v231 = vsel %vm132, %v219, 0
  %233 = vmatprep.subr.bf16.mxu0 0
  %234 = vmatpush1.bf16.msra.mxu0 %v212
  %235 = vmatprep.subr.bf16.mxu0 0
  %236 = vmatpush1.bf16.msra.mxu0 %v213
  %237 = vmatprep.subr.bf16.mxu0 0
  %238 = vmatpush1.bf16.msra.mxu0 %v214
  %239 = vmatprep.subr.bf16.mxu0 0
  %240 = vmatpush1.bf16.msra.mxu0 %v215
  %241 = vmatprep.subr.bf16.mxu0 0
  %242 = vmatpush1.bf16.msra.mxu0 %v216
  %243 = vmatprep.subr.bf16.mxu0 0
  %244 = vmatpush1.bf16.msra.mxu0 %v217
  %245 = vmatprep.subr.bf16.mxu0 0
  %246 = vmatpush1.bf16.msra.mxu0 %v218
  %247 = vmatprep.subr.bf16.mxu0 0
  %248 = vmatpush1.bf16.msra.mxu0 %v231
  %249 = vmatprep.subr.bf16.mxu0 0
  %250 = vmatpush1.bf16.msra.mxu0 0
  %251 = vmatprep.subr.bf16.mxu0 0
  %252 = vmatpush1.bf16.msra.mxu0 0
  %253 = vmatprep.subr.bf16.mxu0 0
  %254 = vmatpush1.bf16.msra.mxu0 0
  %255 = vmatprep.subr.bf16.mxu0 0
  %256 = vmatpush1.bf16.msra.mxu0 0
  %257 = vmatprep.subr.bf16.mxu0 0
  %258 = vmatpush1.bf16.msra.mxu0 0
  %259 = vmatprep.subr.bf16.mxu0 0
  %260 = vmatpush1.bf16.msra.mxu0 0
  %261 = vmatprep.subr.bf16.mxu0 0
  %262 = vmatpush1.bf16.msra.mxu0 0
  %263 = vmatprep.subr.bf16.mxu0 0
  %264 = vmatpush1.bf16.msra.mxu0 0
  %265 = vmatprep.mubr.bf16.mxu0 0
  %266 = vmatmul.mubr.bf16.gmra.mrb[0].mxu0 %v228
  %v267 = vpop.f32.mrb[0].mxu0
  %v268 = vadd.f32 %v171, %v267
  %v269 = vpop.f32.mrb[0].mxu0
  %v270 = vpop.f32.mrb[0].mxu0
  %v271 = vadd.f32 %v174, %v270
  %v272 = vpop.f32.mrb[0].mxu0
  %273 = vdwg.mxu0
  %v274 = vlaneseq
  %v275 = vshrl.u32 %v274, 7
  %v276 = vadd.s32 %v275, 8
  %v277 = vadd.s32 %v275, 16
  %v278 = vadd.s32 %v275, 24
  %v279 = vadd.s32 %v275, 32
  %v280 = vadd.s32 %v275, 40
  %v281 = vadd.s32 %v275, 48
  %v282 = vadd.s32 %v275, 56
  %v283 = vadd.s32 %v275, 64
  %v284 = vadd.s32 %v275, 72
  %v285 = vadd.s32 %v275, 80
  %v286 = vadd.s32 %v275, 88
  %v287 = vadd.s32 %v275, 96
  %v288 = vadd.s32 %v275, 104
  %v289 = vadd.s32 %v275, 112
  %v290 = vadd.s32 %v275, 120
  %v291 = vlaneseq
  %v292 = vand.u32 %v291, 127
  %vm293 = vcmp.lt.s32.totalorder %v275, 0
  %v294 = vsub.s32 0, %v275
  %v295 = vsel %vm293, %v294, %v275
  %v296 = vshrl.u32 %v295, 3
  %v297 = vand.u32 %v295, 7
  %v298 = vsub.s32 0, %v297
  %v299 = vsel %vm293, %v298, %v297
  %vm300 = vcmp.lt.s32.totalorder %v276, 0
  %v301 = vsub.s32 0, %v276
  %v302 = vsel %vm300, %v301, %v276
  %v303 = vshrl.u32 %v302, 3
  %v304 = vand.u32 %v302, 7
  %v305 = vsub.s32 0, %v304
  %v306 = vsel %vm300, %v305, %v304
  %vm307 = vcmp.lt.s32.totalorder %v277, 0
  %v308 = vsub.s32 0, %v277
  %v309 = vsel %vm307, %v308, %v277
  %v310 = vshrl.u32 %v309, 3
  %v311 = vand.u32 %v309, 7
  %v312 = vsub.s32 0, %v311
  %v313 = vsel %vm307, %v312, %v311
  %vm314 = vcmp.lt.s32.totalorder %v278, 0
  %v315 = vsub.s32 0, %v278
  %v316 = vsel %vm314, %v315, %v278
  %v317 = vshrl.u32 %v316, 3
  %v318 = vand.u32 %v316, 7
  %v319 = vsub.s32 0, %v318
  %v320 = vsel %vm314, %v319, %v318
  %vm321 = vcmp.lt.s32.totalorder %v279, 0
  %v322 = vsub.s32 0, %v279
  %v323 = vsel %vm321, %v322, %v279
  %v324 = vshrl.u32 %v323, 3
  %v325 = vand.u32 %v323, 7
  %v326 = vsub.s32 0, %v325
  %v327 = vsel %vm321, %v326, %v325
  %vm328 = vcmp.lt.s32.totalorder %v280, 0
  %v329 = vsub.s32 0, %v280
  %v330 = vsel %vm328, %v329, %v280
  %v331 = vshrl.u32 %v330, 3
  %v332 = vand.u32 %v330, 7
  %v333 = vsub.s32 0, %v332
  %v334 = vsel %vm328, %v333, %v332
  %vm335 = vcmp.lt.s32.totalorder %v281, 0
  %v336 = vsub.s32 0, %v281
  %v337 = vsel %vm335, %v336, %v281
  %v338 = vshrl.u32 %v337, 3
  %v339 = vand.u32 %v337, 7
  %v340 = vsub.s32 0, %v339
  %v341 = vsel %vm335, %v340, %v339
  %vm342 = vcmp.lt.s32.totalorder %v282, 0
  %v343 = vsub.s32 0, %v282
  %v344 = vsel %vm342, %v343, %v282
  %v345 = vshrl.u32 %v344, 3
  %v346 = vand.u32 %v344, 7
  %v347 = vsub.s32 0, %v346
  %v348 = vsel %vm342, %v347, %v346
  %vm349 = vcmp.lt.s32.totalorder %v283, 0
  %v350 = vsub.s32 0, %v283
  %v351 = vsel %vm349, %v350, %v283
  %v352 = vshrl.u32 %v351, 3
  %v353 = vand.u32 %v351, 7
  %v354 = vsub.s32 0, %v353
  %v355 = vsel %vm349, %v354, %v353
  %vm356 = vcmp.lt.s32.totalorder %v284, 0
  %v357 = vsub.s32 0, %v284
  %v358 = vsel %vm356, %v357, %v284
  %v359 = vshrl.u32 %v358, 3
  %v360 = vand.u32 %v358, 7
  %v361 = vsub.s32 0, %v360
  %v362 = vsel %vm356, %v361, %v360
  %vm363 = vcmp.lt.s32.totalorder %v285, 0
  %v364 = vsub.s32 0, %v285
  %v365 = vsel %vm363, %v364, %v285
  %v366 = vshrl.u32 %v365, 3
  %v367 = vand.u32 %v365, 7
  %v368 = vsub.s32 0, %v367
  %v369 = vsel %vm363, %v368, %v367
  %vm370 = vcmp.lt.s32.totalorder %v286, 0
  %v371 = vsub.s32 0, %v286
  %v372 = vsel %vm370, %v371, %v286
  %v373 = vshrl.u32 %v372, 3
  %v374 = vand.u32 %v372, 7
  %v375 = vsub.s32 0, %v374
  %v376 = vsel %vm370, %v375, %v374
  %vm377 = vcmp.lt.s32.totalorder %v287, 0
  %v378 = vsub.s32 0, %v287
  %v379 = vsel %vm377, %v378, %v287
  %v380 = vshrl.u32 %v379, 3
  %v381 = vand.u32 %v379, 7
  %v382 = vsub.s32 0, %v381
  %v383 = vsel %vm377, %v382, %v381
  %vm384 = vcmp.lt.s32.totalorder %v288, 0
  %v385 = vsub.s32 0, %v288
  %v386 = vsel %vm384, %v385, %v288
  %v387 = vshrl.u32 %v386, 3
  %v388 = vand.u32 %v386, 7
  %v389 = vsub.s32 0, %v388
  %v390 = vsel %vm384, %v389, %v388
  %vm391 = vcmp.lt.s32.totalorder %v289, 0
  %v392 = vsub.s32 0, %v289
  %v393 = vsel %vm391, %v392, %v289
  %v394 = vshrl.u32 %v393, 3
  %v395 = vand.u32 %v393, 7
  %v396 = vsub.s32 0, %v395
  %v397 = vsel %vm391, %v396, %v395
  %vm398 = vcmp.lt.s32.totalorder %v290, 0
  %v399 = vsub.s32 0, %v290
  %v400 = vsel %vm398, %v399, %v290
  %v401 = vshrl.u32 %v400, 3
  %v402 = vand.u32 %v400, 7
  %v403 = vsub.s32 0, %v402
  %v404 = vsel %vm398, %v403, %v402
  %vm405 = vcmp.ne.s32.totalorder %v299, 0
  %vm406 = vcmp.ne.s32.totalorder %v306, 0
  %vm407 = vcmp.ne.s32.totalorder %v313, 0
  %vm408 = vcmp.ne.s32.totalorder %v320, 0
  %vm409 = vcmp.ne.s32.totalorder %v327, 0
  %vm410 = vcmp.ne.s32.totalorder %v334, 0
  %vm411 = vcmp.ne.s32.totalorder %v341, 0
  %vm412 = vcmp.ne.s32.totalorder %v348, 0
  %vm413 = vcmp.ne.s32.totalorder %v355, 0
  %vm414 = vcmp.ne.s32.totalorder %v362, 0
  %vm415 = vcmp.ne.s32.totalorder %v369, 0
  %vm416 = vcmp.ne.s32.totalorder %v376, 0
  %vm417 = vcmp.ne.s32.totalorder %v383, 0
  %vm418 = vcmp.ne.s32.totalorder %v390, 0
  %vm419 = vcmp.ne.s32.totalorder %v397, 0
  %vm420 = vcmp.ne.s32.totalorder %v404, 0
  %vm421 = vcmp.lt.s32.totalorder %v299, 0
  %vm422 = vcmp.lt.s32.totalorder %v306, 0
  %vm423 = vcmp.lt.s32.totalorder %v313, 0
  %vm424 = vcmp.lt.s32.totalorder %v320, 0
  %vm425 = vcmp.lt.s32.totalorder %v327, 0
  %vm426 = vcmp.lt.s32.totalorder %v334, 0
  %vm427 = vcmp.lt.s32.totalorder %v341, 0
  %vm428 = vcmp.lt.s32.totalorder %v348, 0
  %vm429 = vcmp.lt.s32.totalorder %v355, 0
  %vm430 = vcmp.lt.s32.totalorder %v362, 0
  %vm431 = vcmp.lt.s32.totalorder %v369, 0
  %vm432 = vcmp.lt.s32.totalorder %v376, 0
  %vm433 = vcmp.lt.s32.totalorder %v383, 0
  %vm434 = vcmp.lt.s32.totalorder %v390, 0
  %vm435 = vcmp.lt.s32.totalorder %v397, 0
  %vm436 = vcmp.lt.s32.totalorder %v404, 0
  %vm437 = vmand %vm421, %vm405
  %vm438 = vmand %vm422, %vm406
  %vm439 = vmand %vm423, %vm407
  %vm440 = vmand %vm424, %vm408
  %vm441 = vmand %vm425, %vm409
  %vm442 = vmand %vm426, %vm410
  %vm443 = vmand %vm427, %vm411
  %vm444 = vmand %vm428, %vm412
  %vm445 = vmand %vm429, %vm413
  %vm446 = vmand %vm430, %vm414
  %vm447 = vmand %vm431, %vm415
  %vm448 = vmand %vm432, %vm416
  %vm449 = vmand %vm433, %vm417
  %vm450 = vmand %vm434, %vm418
  %vm451 = vmand %vm435, %vm419
  %vm452 = vmand %vm436, %vm420
  %v453 = vadd.s32 %v299, 8
  %v454 = vadd.s32 %v306, 8
  %v455 = vadd.s32 %v313, 8
  %v456 = vadd.s32 %v320, 8
  %v457 = vadd.s32 %v327, 8
  %v458 = vadd.s32 %v334, 8
  %v459 = vadd.s32 %v341, 8
  %v460 = vadd.s32 %v348, 8
  %v461 = vadd.s32 %v355, 8
  %v462 = vadd.s32 %v362, 8
  %v463 = vadd.s32 %v369, 8
  %v464 = vadd.s32 %v376, 8
  %v465 = vadd.s32 %v383, 8
  %v466 = vadd.s32 %v390, 8
  %v467 = vadd.s32 %v397, 8
  %v468 = vadd.s32 %v404, 8
  %v469 = vsel %vm437, %v453, %v299
  %v470 = vsel %vm438, %v454, %v306
  %v471 = vsel %vm439, %v455, %v313
  %v472 = vsel %vm440, %v456, %v320
  %v473 = vsel %vm441, %v457, %v327
  %v474 = vsel %vm442, %v458, %v334
  %v475 = vsel %vm443, %v459, %v341
  %v476 = vsel %vm444, %v460, %v348
  %v477 = vsel %vm445, %v461, %v355
  %v478 = vsel %vm446, %v462, %v362
  %v479 = vsel %vm447, %v463, %v369
  %v480 = vsel %vm448, %v464, %v376
  %v481 = vsel %vm449, %v465, %v383
  %v482 = vsel %vm450, %v466, %v390
  %v483 = vsel %vm451, %v467, %v397
  %v484 = vsel %vm452, %v468, %v404
  %vm485 = vcmp.lt.s32.totalorder %v292, 0
  %v486 = vsub.s32 0, %v292
  %v487 = vsel %vm485, %v486, %v292
  %v488 = vshrl.u32 %v487, 3
  %v489 = vand.u32 %v487, 7
  %v490 = vsub.s32 0, %v489
  %v491 = vsel %vm485, %v490, %v489
  %vm492 = vcmp.ne.s32.totalorder %v491, 0
  %vm493 = vcmp.lt.s32.totalorder %v491, 0
  %vm494 = vmand %vm493, %vm492
  %v495 = vadd.s32 %v491, 8
  %v496 = vsel %vm494, %v495, %v491
  %vm497 = vcmp.eq.s32.totalorder %v469, %v496
  %vm498 = vcmp.eq.s32.totalorder %v470, %v496
  %vm499 = vcmp.eq.s32.totalorder %v471, %v496
  %vm500 = vcmp.eq.s32.totalorder %v472, %v496
  %vm501 = vcmp.eq.s32.totalorder %v473, %v496
  %vm502 = vcmp.eq.s32.totalorder %v474, %v496
  %vm503 = vcmp.eq.s32.totalorder %v475, %v496
  %vm504 = vcmp.eq.s32.totalorder %v476, %v496
  %vm505 = vcmp.eq.s32.totalorder %v477, %v496
  %vm506 = vcmp.eq.s32.totalorder %v478, %v496
  %vm507 = vcmp.eq.s32.totalorder %v479, %v496
  %vm508 = vcmp.eq.s32.totalorder %v480, %v496
  %vm509 = vcmp.eq.s32.totalorder %v481, %v496
  %vm510 = vcmp.eq.s32.totalorder %v482, %v496
  %vm511 = vcmp.eq.s32.totalorder %v483, %v496
  %vm512 = vcmp.eq.s32.totalorder %v484, %v496
  %v513 = vsel %vm497, 1, 0
  %v514 = vsel %vm498, 1, 0
  %v515 = vsel %vm499, 1, 0
  %v516 = vsel %vm500, 1, 0
  %v517 = vsel %vm501, 1, 0
  %v518 = vsel %vm502, 1, 0
  %v519 = vsel %vm503, 1, 0
  %v520 = vsel %vm504, 1, 0
  %v521 = vsel %vm505, 1, 0
  %v522 = vsel %vm506, 1, 0
  %v523 = vsel %vm507, 1, 0
  %v524 = vsel %vm508, 1, 0
  %v525 = vsel %vm509, 1, 0
  %v526 = vsel %vm510, 1, 0
  %v527 = vsel %vm511, 1, 0
  %v528 = vsel %vm512, 1, 0
  %v529 = vcvt.s32.f32 %v513
  %v530 = vcvt.s32.f32 %v514
  %v531 = vcvt.s32.f32 %v515
  %v532 = vcvt.s32.f32 %v516
  %v533 = vcvt.s32.f32 %v517
  %v534 = vcvt.s32.f32 %v518
  %v535 = vcvt.s32.f32 %v519
  %v536 = vcvt.s32.f32 %v520
  %v537 = vcvt.s32.f32 %v521
  %v538 = vcvt.s32.f32 %v522
  %v539 = vcvt.s32.f32 %v523
  %v540 = vcvt.s32.f32 %v524
  %v541 = vcvt.s32.f32 %v525
  %v542 = vcvt.s32.f32 %v526
  %v543 = vcvt.s32.f32 %v527
  %v544 = vcvt.s32.f32 %v528
  %545 = vmatprep.subr.mxu0 0.0
  %546 = vmatpush1.msra.mxu0 %v529
  %547 = vmatprep.subr.mxu0 0.0
  %548 = vmatpush1.msra.mxu0 %v530
  %549 = vmatprep.subr.mxu0 0.0
  %550 = vmatpush1.msra.mxu0 %v531
  %551 = vmatprep.subr.mxu0 0.0
  %552 = vmatpush1.msra.mxu0 %v532
  %553 = vmatprep.subr.mxu0 0.0
  %554 = vmatpush1.msra.mxu0 %v533
  %555 = vmatprep.subr.mxu0 0.0
  %556 = vmatpush1.msra.mxu0 %v534
  %557 = vmatprep.subr.mxu0 0.0
  %558 = vmatpush1.msra.mxu0 %v535
  %559 = vmatprep.subr.mxu0 0.0
  %560 = vmatpush1.msra.mxu0 %v536
  %561 = vmatprep.subr.mxu0 0.0
  %562 = vmatpush1.msra.mxu0 %v537
  %563 = vmatprep.subr.mxu0 0.0
  %564 = vmatpush1.msra.mxu0 %v538
  %565 = vmatprep.subr.mxu0 0.0
  %566 = vmatpush1.msra.mxu0 %v539
  %567 = vmatprep.subr.mxu0 0.0
  %568 = vmatpush1.msra.mxu0 %v540
  %569 = vmatprep.subr.mxu0 0.0
  %570 = vmatpush1.msra.mxu0 %v541
  %571 = vmatprep.subr.mxu0 0.0
  %572 = vmatpush1.msra.mxu0 %v542
  %573 = vmatprep.subr.mxu0 0.0
  %574 = vmatpush1.msra.mxu0 %v543
  %575 = vmatprep.subr.mxu0 0.0
  %576 = vmatpush1.msra.mxu0 %v544
  %577 = vmatprep.subr.mxu0 0.0
  %578 = vmatpush1.msra.mxu0 0.0
  %579 = vmatprep.subr.mxu0 0.0
  %580 = vmatpush1.msra.mxu0 0.0
  %581 = vmatprep.subr.mxu0 0.0
  %582 = vmatpush1.msra.mxu0 0.0
  %583 = vmatprep.subr.mxu0 0.0
  %584 = vmatpush1.msra.mxu0 0.0
  %585 = vmatprep.subr.mxu0 0.0
  %586 = vmatpush1.msra.mxu0 0.0
  %587 = vmatprep.subr.mxu0 0.0
  %588 = vmatpush1.msra.mxu0 0.0
  %589 = vmatprep.subr.mxu0 0.0
  %590 = vmatpush1.msra.mxu0 0.0
  %591 = vmatprep.subr.mxu0 0.0
  %592 = vmatpush1.msra.mxu0 0.0
  %593 = vmatprep.subr.mxu0 0.0
  %594 = vmatpush1.msra.mxu0 0.0
  %595 = vmatprep.subr.mxu0 0.0
  %596 = vmatpush1.msra.mxu0 0.0
  %597 = vmatprep.subr.mxu0 0.0
  %598 = vmatpush1.msra.mxu0 0.0
  %599 = vmatprep.subr.mxu0 0.0
  %600 = vmatpush1.msra.mxu0 0.0
  %601 = vmatprep.subr.mxu0 0.0
  %602 = vmatpush1.msra.mxu0 0.0
  %603 = vmatprep.subr.mxu0 0.0
  %604 = vmatpush1.msra.mxu0 0.0
  %605 = vmatprep.subr.mxu0 0.0
  %606 = vmatpush1.msra.mxu0 0.0
  %607 = vmatprep.subr.mxu0 0.0
  %608 = vmatpush1.msra.mxu0 0.0
  %609 = vmatprep.mubr.f32.mxu0 0.0
  %610 = vmatmul.mubr.f32.gmra.mrb[0].mxu0 %v268
  %v611 = vpop.f32.mrb[0].mxu0
  %v612 = vadd.f32 0.0, %v611
  %v613 = vpop.f32.mrb[0].mxu0
  %614 = vmatprep.mubr.f32.mxu0 0.0
  %615 = vmatmul.mubr.f32.gmra.mrb[0].mxu0 %v271
  %v616 = vpop.f32.mrb[0].mxu0
  %v617 = vadd.f32 0.0, %v616
  %v618 = vpop.f32.mrb[0].mxu0
  %619 = vdwg.mxu0
  %v620 = vadd.f32 %v612, %v617
  %v621 = vrot.slane %v620, 4
  %v622 = vadd.f32 %v620, %v621
  %v623 = vrot.slane %v622, 2
  %v624 = vadd.f32 %v622, %v623
  %v625 = vrot.slane %v624, 1
  %v626 = vadd.f32 %v624, %v625
  %v627 = vmul.f32 %v626, 0.00390625
  %v628 = vsub.f32 %v268, %v627
  %v629 = vsub.f32 %v271, %v627
  %v630 = vmul.f32 %v628, %v628
  %v631 = vmul.f32 %v629, %v629
  %632 = vmatprep.subr.mxu0 0.0
  %633 = vmatpush1.msra.mxu0 %v529
  %634 = vmatprep.subr.mxu0 0.0
  %635 = vmatpush1.msra.mxu0 %v530
  %636 = vmatprep.subr.mxu0 0.0
  %637 = vmatpush1.msra.mxu0 %v531
  %638 = vmatprep.subr.mxu0 0.0
  %639 = vmatpush1.msra.mxu0 %v532
  %640 = vmatprep.subr.mxu0 0.0
  %641 = vmatpush1.msra.mxu0 %v533
  %642 = vmatprep.subr.mxu0 0.0
  %643 = vmatpush1.msra.mxu0 %v534
  %644 = vmatprep.subr.mxu0 0.0
  %645 = vmatpush1.msra.mxu0 %v535
  %646 = vmatprep.subr.mxu0 0.0
  %647 = vmatpush1.msra.mxu0 %v536
  %648 = vmatprep.subr.mxu0 0.0
  %649 = vmatpush1.msra.mxu0 %v537
  %650 = vmatprep.subr.mxu0 0.0
  %651 = vmatpush1.msra.mxu0 %v538
  %652 = vmatprep.subr.mxu0 0.0
  %653 = vmatpush1.msra.mxu0 %v539
  %654 = vmatprep.subr.mxu0 0.0
  %655 = vmatpush1.msra.mxu0 %v540
  %656 = vmatprep.subr.mxu0 0.0
  %657 = vmatpush1.msra.mxu0 %v541
  %658 = vmatprep.subr.mxu0 0.0
  %659 = vmatpush1.msra.mxu0 %v542
  %660 = vmatprep.subr.mxu0 0.0
  %661 = vmatpush1.msra.mxu0 %v543
  %662 = vmatprep.subr.mxu0 0.0
  %663 = vmatpush1.msra.mxu0 %v544
  %664 = vmatprep.subr.mxu0 0.0
  %665 = vmatpush1.msra.mxu0 0.0
  %666 = vmatprep.subr.mxu0 0.0
  %667 = vmatpush1.msra.mxu0 0.0
  %668 = vmatprep.subr.mxu0 0.0
  %669 = vmatpush1.msra.mxu0 0.0
  %670 = vmatprep.subr.mxu0 0.0
  %671 = vmatpush1.msra.mxu0 0.0
  %672 = vmatprep.subr.mxu0 0.0
  %673 = vmatpush1.msra.mxu0 0.0
  %674 = vmatprep.subr.mxu0 0.0
  %675 = vmatpush1.msra.mxu0 0.0
  %676 = vmatprep.subr.mxu0 0.0
  %677 = vmatpush1.msra.mxu0 0.0
  %678 = vmatprep.subr.mxu0 0.0
  %679 = vmatpush1.msra.mxu0 0.0
  %680 = vmatprep.subr.mxu0 0.0
  %681 = vmatpush1.msra.mxu0 0.0
  %682 = vmatprep.subr.mxu0 0.0
  %683 = vmatpush1.msra.mxu0 0.0
  %684 = vmatprep.subr.mxu0 0.0
  %685 = vmatpush1.msra.mxu0 0.0
  %686 = vmatprep.subr.mxu0 0.0
  %687 = vmatpush1.msra.mxu0 0.0
  %688 = vmatprep.subr.mxu0 0.0
  %689 = vmatpush1.msra.mxu0 0.0
  %690 = vmatprep.subr.mxu0 0.0
  %691 = vmatpush1.msra.mxu0 0.0
  %692 = vmatprep.subr.mxu0 0.0
  %693 = vmatpush1.msra.mxu0 0.0
  %694 = vmatprep.subr.mxu0 0.0
  %695 = vmatpush1.msra.mxu0 0.0
  %696 = vmatprep.mubr.f32.mxu0 0.0
  %697 = vmatmul.mubr.f32.gmra.mrb[0].mxu0 %v630
  %v698 = vpop.f32.mrb[0].mxu0
  %v699 = vadd.f32 0.0, %v698
  %v700 = vpop.f32.mrb[0].mxu0
  %701 = vmatprep.mubr.f32.mxu0 0.0
  %702 = vmatmul.mubr.f32.gmra.mrb[0].mxu0 %v631
  %v703 = vpop.f32.mrb[0].mxu0
  %v704 = vadd.f32 0.0, %v703
  %v705 = vpop.f32.mrb[0].mxu0
  %706 = vdwg.mxu0
  %v707 = vadd.f32 %v699, %v704
  %v708 = vrot.slane %v707, 4
  %v709 = vadd.f32 %v707, %v708
  %v710 = vrot.slane %v709, 2
  %v711 = vadd.f32 %v709, %v710
  %v712 = vrot.slane %v711, 1
  %v713 = vadd.f32 %v711, %v712
  %v714 = vmul.f32 %v713, 0.00390625
  %v715 = vld [vmem:[%s8] sm:$0x1]
  %v716 = vadd.f32 %v714, 1e-05
  %v717 = vrsqrt.pop %v716
  %v718 = vmul.f32 %v715, %v717
  %v719 = vld [vmem:[%s10] sm:$0x1]
  %v720 = vmul.f32 %v627, %v718
  %v721 = vsub.f32 %v719, %v720
  %v723 = vlaneseq
  %v724 = vshrl.u32 %v723, 7
  %v725 = vsub.s32 0, %v724
  %v726 = vrot.slane %v718, %v725
  %v728 = vmul.f32 %v268, %v726
  %v729 = vmul.f32 %v271, %v726
  %v731 = vlaneseq
  %v732 = vshrl.u32 %v731, 7
  %v733 = vsub.s32 0, %v732
  %v734 = vrot.slane %v721, %v733
  %v736 = vadd.f32 %v728, %v734
  %v737 = vadd.f32 %v729, %v734
  %v738 = vmax.f32 %v736, 0.0
  %v739 = vmax.f32 %v737, 0.0
  %740 = vst [vmem:[%s12] sm:$0xff] %v738
  %741 = vst [vmem:[%s12 + $0x8] sm:$0xff] %v739
  %v742 = vld [vmem:[%s2] sm:$0xff]
  %v743 = vld [vmem:[%s2 + $0x8] sm:$0xff]
  %v744 = vld [vmem:[%s2 + $0x10] sm:$0xff]
  %v745 = vld [vmem:[%s2 + $0x18] sm:$0xff]
  %v746 = vld [vmem:[%s6] sm:$0xf]
  %v747 = vld [vmem:[%s6 + $0x4] sm:$0xf]
  %v748 = vld [vmem:[%s6 + $0x8] sm:$0xf]
  %v749 = vld [vmem:[%s6 + $0xc] sm:$0xf]
  %v750 = vld [vmem:[%s6 + $0x10] sm:$0xf]
  %v751 = vld [vmem:[%s6 + $0x14] sm:$0xf]
  %v752 = vld [vmem:[%s6 + $0x18] sm:$0xf]
  %v753 = vld [vmem:[%s6 + $0x1c] sm:$0xf]
  %v754 = vld [vmem:[%s6 + $0x20] sm:$0xf]
  %v755 = vld [vmem:[%s6 + $0x24] sm:$0xf]
  %v756 = vld [vmem:[%s6 + $0x28] sm:$0xf]
  %v757 = vld [vmem:[%s6 + $0x2c] sm:$0xf]
  %v758 = vld [vmem:[%s6 + $0x30] sm:$0xf]
  %v759 = vld [vmem:[%s6 + $0x34] sm:$0xf]
  %v760 = vld [vmem:[%s6 + $0x38] sm:$0xf]
  %v761 = vld [vmem:[%s6 + $0x3c] sm:$0xf]
  %v762 = vld [vmem:[%s6 + $0x40] sm:$0xf]
  %v763 = vld [vmem:[%s6 + $0x44] sm:$0xf]
  %v764 = vld [vmem:[%s6 + $0x48] sm:$0xf]
  %v765 = vld [vmem:[%s6 + $0x4c] sm:$0xf]
  %v766 = vld [vmem:[%s6 + $0x50] sm:$0xf]
  %v767 = vld [vmem:[%s6 + $0x54] sm:$0xf]
  %v768 = vld [vmem:[%s6 + $0x58] sm:$0xf]
  %v769 = vld [vmem:[%s6 + $0x5c] sm:$0xf]
  %v770 = vld [vmem:[%s6 + $0x60] sm:$0xf]
  %v771 = vld [vmem:[%s6 + $0x64] sm:$0xf]
  %v772 = vld [vmem:[%s6 + $0x68] sm:$0xf]
  %v773 = vld [vmem:[%s3] sm:$0xf]
  %v774 = vld [vmem:[%s3 + $0x4] sm:$0xf]
  %v775 = vld [vmem:[%s3 + $0x8] sm:$0xf]
  %v776 = vld [vmem:[%s3 + $0xc] sm:$0xf]
  %v777 = vld [vmem:[%s7] sm:$0xf]
  %v778 = vld [vmem:[%s7 + $0x4] sm:$0xf]
  %v779 = vld [vmem:[%s7 + $0x8] sm:$0xf]
  %v780 = vld [vmem:[%s7 + $0xc] sm:$0xf]
  %v781 = vld [vmem:[%s7 + $0x10] sm:$0xf]
  %v782 = vld [vmem:[%s7 + $0x14] sm:$0xf]
  %v783 = vld [vmem:[%s7 + $0x18] sm:$0xf]
  %v784 = vld [vmem:[%s7 + $0x1c] sm:$0xf]
  %v785 = vld [vmem:[%s7 + $0x20] sm:$0xf]
  %v786 = vld [vmem:[%s7 + $0x24] sm:$0xf]
  %v787 = vld [vmem:[%s7 + $0x28] sm:$0xf]
  %v788 = vld [vmem:[%s7 + $0x2c] sm:$0xf]
  %v789 = vld [vmem:[%s7 + $0x30] sm:$0xf]
  %v790 = vld [vmem:[%s7 + $0x34] sm:$0xf]
  %v791 = vld [vmem:[%s7 + $0x38] sm:$0xf]
  %v796 = vunpack.c.l.b16 %v773
  %v797 = vunpack.c.l.b16 %v774
  %v798 = vunpack.c.l.b16 %v775
  %v799 = vunpack.c.l.b16 %v776
  %v800 = vpack.c.b16 %v797, %v796
  %v801 = vpack.c.b16 %v799, %v798
  %v817 = vunpack.c.l.b16 %v777
  %v818 = vunpack.c.l.b16 %v778
  %v819 = vunpack.c.l.b16 %v779
  %v820 = vunpack.c.l.b16 %v780
  %v821 = vunpack.c.l.b16 %v781
  %v822 = vunpack.c.l.b16 %v782
  %v823 = vunpack.c.l.b16 %v783
  %v824 = vunpack.c.l.b16 %v784
  %v825 = vunpack.c.l.b16 %v785
  %v826 = vunpack.c.l.b16 %v786
  %v827 = vunpack.c.l.b16 %v787
  %v828 = vunpack.c.l.b16 %v788
  %v829 = vunpack.c.l.b16 %v789
  %v830 = vunpack.c.l.b16 %v790
  %v831 = vunpack.c.l.b16 %v791
  %v832 = vpack.c.b16 %v818, %v817
  %v833 = vpack.c.b16 %v820, %v819
  %v834 = vpack.c.b16 %v822, %v821
  %v835 = vpack.c.b16 %v824, %v823
  %v836 = vpack.c.b16 %v826, %v825
  %v837 = vpack.c.b16 %v828, %v827
  %v838 = vpack.c.b16 %v830, %v829
  %v839 = vpack.c.b16 %v831, %v831
  %v848 = vsel %vm128, %v800, 0
  %v851 = vsel %vm128, %v801, 0
  %v854 = vsel %vm132, %v839, 0
  %856 = vmatprep.subr.bf16.mxu0 0
  %857 = vmatpush1.bf16.msra.mxu0 %v832
  %858 = vmatprep.subr.bf16.mxu0 0
  %859 = vmatpush1.bf16.msra.mxu0 %v833
  %860 = vmatprep.subr.bf16.mxu0 0
  %861 = vmatpush1.bf16.msra.mxu0 %v834
  %862 = vmatprep.subr.bf16.mxu0 0
  %863 = vmatpush1.bf16.msra.mxu0 %v835
  %864 = vmatprep.subr.bf16.mxu0 0
  %865 = vmatpush1.bf16.msra.mxu0 %v836
  %866 = vmatprep.subr.bf16.mxu0 0
  %867 = vmatpush1.bf16.msra.mxu0 %v837
  %868 = vmatprep.subr.bf16.mxu0 0
  %869 = vmatpush1.bf16.msra.mxu0 %v838
  %870 = vmatprep.subr.bf16.mxu0 0
  %871 = vmatpush1.bf16.msra.mxu0 %v854
  %872 = vmatprep.subr.bf16.mxu0 0
  %873 = vmatpush1.bf16.msra.mxu0 0
  %874 = vmatprep.subr.bf16.mxu0 0
  %875 = vmatpush1.bf16.msra.mxu0 0
  %876 = vmatprep.subr.bf16.mxu0 0
  %877 = vmatpush1.bf16.msra.mxu0 0
  %878 = vmatprep.subr.bf16.mxu0 0
  %879 = vmatpush1.bf16.msra.mxu0 0
  %880 = vmatprep.subr.bf16.mxu0 0
  %881 = vmatpush1.bf16.msra.mxu0 0
  %882 = vmatprep.subr.bf16.mxu0 0
  %883 = vmatpush1.bf16.msra.mxu0 0
  %884 = vmatprep.subr.bf16.mxu0 0
  %885 = vmatpush1.bf16.msra.mxu0 0
  %886 = vmatprep.subr.bf16.mxu0 0
  %887 = vmatpush1.bf16.msra.mxu0 0
  %888 = vmatprep.mubr.bf16.mxu0 0
  %889 = vmatmul.mubr.bf16.gmra.mrb[0].mxu0 %v848
  %v890 = vpop.f32.mrb[0].mxu0
  %v891 = vadd.f32 0.0, %v890
  %v892 = vpop.f32.mrb[0].mxu0
  %v893 = vpop.f32.mrb[0].mxu0
  %v894 = vadd.f32 0.0, %v893
  %v895 = vpop.f32.mrb[0].mxu0
  %896 = vmatprep.mubr.bf16.mxu0 0
  %897 = vmatmul.mubr.bf16.gmra.mrb[0].mxu0 %v851
  %v898 = vpop.f32.mrb[0].mxu0
  %v899 = vadd.f32 0.0, %v898
  %v900 = vpop.f32.mrb[0].mxu0
  %v901 = vpop.f32.mrb[0].mxu0
  %v902 = vadd.f32 0.0, %v901
  %v903 = vpop.f32.mrb[0].mxu0
  %904 = vdwg.mxu0
  %v909 = vunpack.c.l.b16 %v742
  %v910 = vunpack.c.h.b16 %v742
  %v911 = vunpack.c.l.b16 %v743
  %v912 = vunpack.c.h.b16 %v743
  %v913 = vunpack.c.l.b16 %v744
  %v914 = vunpack.c.h.b16 %v744
  %v915 = vunpack.c.l.b16 %v745
  %v916 = vunpack.c.h.b16 %v745
  %v917 = vpack.c.b16 %v911, %v909
  %v918 = vpack.c.b16 %v912, %v910
  %v919 = vpack.c.b16 %v915, %v913
  %v920 = vpack.c.b16 %v916, %v914
  %v950 = vunpack.c.l.b16 %v746
  %v951 = vunpack.c.l.b16 %v747
  %v952 = vunpack.c.l.b16 %v748
  %v953 = vunpack.c.l.b16 %v749
  %v954 = vunpack.c.l.b16 %v750
  %v955 = vunpack.c.l.b16 %v751
  %v956 = vunpack.c.l.b16 %v752
  %v957 = vunpack.c.l.b16 %v753
  %v958 = vunpack.c.l.b16 %v754
  %v959 = vunpack.c.l.b16 %v755
  %v960 = vunpack.c.l.b16 %v756
  %v961 = vunpack.c.l.b16 %v757
  %v962 = vunpack.c.l.b16 %v758
  %v963 = vunpack.c.l.b16 %v759
  %v964 = vunpack.c.l.b16 %v760
  %v965 = vunpack.c.l.b16 %v761
  %v966 = vunpack.c.l.b16 %v762
  %v967 = vunpack.c.l.b16 %v763
  %v968 = vunpack.c.l.b16 %v764
  %v969 = vunpack.c.l.b16 %v765
  %v970 = vunpack.c.l.b16 %v766
  %v971 = vunpack.c.l.b16 %v767
  %v972 = vunpack.c.l.b16 %v768
  %v973 = vunpack.c.l.b16 %v769
  %v974 = vunpack.c.l.b16 %v770
  %v975 = vunpack.c.l.b16 %v771
  %v976 = vunpack.c.l.b16 %v772
  %v977 = vpack.c.b16 %v951, %v950
  %v978 = vpack.c.b16 %v953, %v952
  %v979 = vpack.c.b16 %v955, %v954
  %v980 = vpack.c.b16 %v957, %v956
  %v981 = vpack.c.b16 %v959, %v958
  %v982 = vpack.c.b16 %v961, %v960
  %v983 = vpack.c.b16 %v963, %v962
  %v984 = vpack.c.b16 %v965, %v964
  %v985 = vpack.c.b16 %v967, %v966
  %v986 = vpack.c.b16 %v969, %v968
  %v987 = vpack.c.b16 %v971, %v970
  %v988 = vpack.c.b16 %v973, %v972
  %v989 = vpack.c.b16 %v975, %v974
  %v990 = vpack.c.b16 %v976, %v976
  %vm1004 = vcmask 719872
  %v1006 = vsel %vm1004, %v918, 0
  %v1009 = vsel %vm1004, %v920, 0
  %v1012 = vsel %vm132, %v990, 0
  %1014 = vmatprep.subr.bf16.mxu0 0
  %1015 = vmatpush1.bf16.msra.mxu0 %v977
  %1016 = vmatprep.subr.bf16.mxu0 0
  %1017 = vmatpush1.bf16.msra.mxu0 %v978
  %1018 = vmatprep.subr.bf16.mxu0 0
  %1019 = vmatpush1.bf16.msra.mxu0 %v979
  %1020 = vmatprep.subr.bf16.mxu0 0
  %1021 = vmatpush1.bf16.msra.mxu0 %v980
  %1022 = vmatprep.subr.bf16.mxu0 0
  %1023 = vmatpush1.bf16.msra.mxu0 %v981
  %1024 = vmatprep.subr.bf16.mxu0 0
  %1025 = vmatpush1.bf16.msra.mxu0 %v982
  %1026 = vmatprep.subr.bf16.mxu0 0
  %1027 = vmatpush1.bf16.msra.mxu0 %v983
  %1028 = vmatprep.subr.bf16.mxu0 0
  %1029 = vmatpush1.bf16.msra.mxu0 %v984
  %1030 = vmatprep.subr.bf16.mxu0 0
  %1031 = vmatpush1.bf16.msra.mxu0 %v985
  %1032 = vmatprep.subr.bf16.mxu0 0
  %1033 = vmatpush1.bf16.msra.mxu0 %v986
  %1034 = vmatprep.subr.bf16.mxu0 0
  %1035 = vmatpush1.bf16.msra.mxu0 %v987
  %1036 = vmatprep.subr.bf16.mxu0 0
  %1037 = vmatpush1.bf16.msra.mxu0 %v988
  %1038 = vmatprep.subr.bf16.mxu0 0
  %1039 = vmatpush1.bf16.msra.mxu0 %v989
  %1040 = vmatprep.subr.bf16.mxu0 0
  %1041 = vmatpush1.bf16.msra.mxu0 %v1012
  %1042 = vmatprep.subr.bf16.mxu0 0
  %1043 = vmatpush1.bf16.msra.mxu0 0
  %1044 = vmatprep.subr.bf16.mxu0 0
  %1045 = vmatpush1.bf16.msra.mxu0 0
  %1046 = vmatprep.mubr.bf16.mxu0 %v1006
  %1047 = vmatmul.mubr.bf16.gmra.mrb[0].mxu0 %v917
  %v1048 = vpop.f32.mrb[0].mxu0
  %v1049 = vadd.f32 %v891, %v1048
  %v1050 = vpop.f32.mrb[0].mxu0
  %v1051 = vpop.f32.mrb[0].mxu0
  %v1052 = vadd.f32 %v894, %v1051
  %v1053 = vpop.f32.mrb[0].mxu0
  %1054 = vmatprep.mubr.bf16.mxu0 %v1009
  %1055 = vmatmul.mubr.bf16.gmra.mrb[0].mxu0 %v919
  %v1056 = vpop.f32.mrb[0].mxu0
  %v1057 = vadd.f32 %v899, %v1056
  %v1058 = vpop.f32.mrb[0].mxu0
  %v1059 = vpop.f32.mrb[0].mxu0
  %v1060 = vadd.f32 %v902, %v1059
  %v1061 = vpop.f32.mrb[0].mxu0
  %1062 = vdwg.mxu0
  %1063 = vmatprep.subr.mxu0 0.0
  %1064 = vmatpush1.msra.mxu0 %v529
  %1065 = vmatprep.subr.mxu0 0.0
  %1066 = vmatpush1.msra.mxu0 %v530
  %1067 = vmatprep.subr.mxu0 0.0
  %1068 = vmatpush1.msra.mxu0 %v531
  %1069 = vmatprep.subr.mxu0 0.0
  %1070 = vmatpush1.msra.mxu0 %v532
  %1071 = vmatprep.subr.mxu0 0.0
  %1072 = vmatpush1.msra.mxu0 %v533
  %1073 = vmatprep.subr.mxu0 0.0
  %1074 = vmatpush1.msra.mxu0 %v534
  %1075 = vmatprep.subr.mxu0 0.0
  %1076 = vmatpush1.msra.mxu0 %v535
  %1077 = vmatprep.subr.mxu0 0.0
  %1078 = vmatpush1.msra.mxu0 %v536
  %1079 = vmatprep.subr.mxu0 0.0
  %1080 = vmatpush1.msra.mxu0 %v537
  %1081 = vmatprep.subr.mxu0 0.0
  %1082 = vmatpush1.msra.mxu0 %v538
  %1083 = vmatprep.subr.mxu0 0.0
  %1084 = vmatpush1.msra.mxu0 %v539
  %1085 = vmatprep.subr.mxu0 0.0
  %1086 = vmatpush1.msra.mxu0 %v540
  %1087 = vmatprep.subr.mxu0 0.0
  %1088 = vmatpush1.msra.mxu0 %v541
  %1089 = vmatprep.subr.mxu0 0.0
  %1090 = vmatpush1.msra.mxu0 %v542
  %1091 = vmatprep.subr.mxu0 0.0
  %1092 = vmatpush1.msra.mxu0 %v543
  %1093 = vmatprep.subr.mxu0 0.0
  %1094 = vmatpush1.msra.mxu0 %v544
  %1095 = vmatprep.subr.mxu0 0.0
  %1096 = vmatpush1.msra.mxu0 0.0
  %1097 = vmatprep.subr.mxu0 0.0
  %1098 = vmatpush1.msra.mxu0 0.0
  %1099 = vmatprep.subr.mxu0 0.0
  %1100 = vmatpush1.msra.mxu0 0.0
  %1101 = vmatprep.subr.mxu0 0.0
  %1102 = vmatpush1.msra.mxu0 0.0
  %1103 = vmatprep.subr.mxu0 0.0
  %1104 = vmatpush1.msra.mxu0 0.0
  %1105 = vmatprep.subr.mxu0 0.0
  %1106 = vmatpush1.msra.mxu0 0.0
  %1107 = vmatprep.subr.mxu0 0.0
  %1108 = vmatpush1.msra.mxu0 0.0
  %1109 = vmatprep.subr.mxu0 0.0
  %1110 = vmatpush1.msra.mxu0 0.0
  %1111 = vmatprep.subr.mxu0 0.0
  %1112 = vmatpush1.msra.mxu0 0.0
  %1113 = vmatprep.subr.mxu0 0.0
  %1114 = vmatpush1.msra.mxu0 0.0
  %1115 = vmatprep.subr.mxu0 0.0
  %1116 = vmatpush1.msra.mxu0 0.0
  %1117 = vmatprep.subr.mxu0 0.0
  %1118 = vmatpush1.msra.mxu0 0.0
  %1119 = vmatprep.subr.mxu0 0.0
  %1120 = vmatpush1.msra.mxu0 0.0
  %1121 = vmatprep.subr.mxu0 0.0
  %1122 = vmatpush1.msra.mxu0 0.0
  %1123 = vmatprep.subr.mxu0 0.0
  %1124 = vmatpush1.msra.mxu0 0.0
  %1125 = vmatprep.subr.mxu0 0.0
  %1126 = vmatpush1.msra.mxu0 0.0
  %1127 = vmatprep.mubr.f32.mxu0 0.0
  %1128 = vmatmul.mubr.f32.gmra.mrb[0].mxu0 %v1049
  %v1129 = vpop.f32.mrb[0].mxu0
  %v1130 = vadd.f32 0.0, %v1129
  %v1131 = vpop.f32.mrb[0].mxu0
  %1132 = vmatprep.mubr.f32.mxu0 0.0
  %1133 = vmatmul.mubr.f32.gmra.mrb[0].mxu0 %v1052
  %v1134 = vpop.f32.mrb[0].mxu0
  %v1135 = vadd.f32 0.0, %v1134
  %v1136 = vpop.f32.mrb[0].mxu0
  %1137 = vmatprep.mubr.f32.mxu0 0.0
  %1138 = vmatmul.mubr.f32.gmra.mrb[0].mxu0 %v1057
  %v1139 = vpop.f32.mrb[0].mxu0
  %v1140 = vadd.f32 0.0, %v1139
  %v1141 = vpop.f32.mrb[0].mxu0
  %1142 = vmatprep.mubr.f32.mxu0 0.0
  %1143 = vmatmul.mubr.f32.gmra.mrb[0].mxu0 %v1060
  %v1144 = vpop.f32.mrb[0].mxu0
  %v1145 = vadd.f32 0.0, %v1144
  %v1146 = vpop.f32.mrb[0].mxu0
  %1147 = vdwg.mxu0
  %v1148 = vadd.f32 %v1130, %v1135
  %v1149 = vadd.f32 %v1148, %v1140
  %v1150 = vadd.f32 %v1149, %v1145
  %v1151 = vrot.slane %v1150, 4
  %v1152 = vadd.f32 %v1150, %v1151
  %v1153 = vrot.slane %v1152, 2
  %v1154 = vadd.f32 %v1152, %v1153
  %v1155 = vrot.slane %v1154, 1
  %v1156 = vadd.f32 %v1154, %v1155
  %v1157 = vmul.f32 %v1156, 0.001953125
  %v1158 = vsub.f32 %v1049, %v1157
  %v1159 = vsub.f32 %v1052, %v1157
  %v1160 = vsub.f32 %v1057, %v1157
  %v1161 = vsub.f32 %v1060, %v1157
  %v1162 = vmul.f32 %v1158, %v1158
  %v1163 = vmul.f32 %v1159, %v1159
  %v1164 = vmul.f32 %v1160, %v1160
  %v1165 = vmul.f32 %v1161, %v1161
  %1166 = vmatprep.subr.mxu0 0.0
  %1167 = vmatpush1.msra.mxu0 %v529
  %1168 = vmatprep.subr.mxu0 0.0
  %1169 = vmatpush1.msra.mxu0 %v530
  %1170 = vmatprep.subr.mxu0 0.0
  %1171 = vmatpush1.msra.mxu0 %v531
  %1172 = vmatprep.subr.mxu0 0.0
  %1173 = vmatpush1.msra.mxu0 %v532
  %1174 = vmatprep.subr.mxu0 0.0
  %1175 = vmatpush1.msra.mxu0 %v533
  %1176 = vmatprep.subr.mxu0 0.0
  %1177 = vmatpush1.msra.mxu0 %v534
  %1178 = vmatprep.subr.mxu0 0.0
  %1179 = vmatpush1.msra.mxu0 %v535
  %1180 = vmatprep.subr.mxu0 0.0
  %1181 = vmatpush1.msra.mxu0 %v536
  %1182 = vmatprep.subr.mxu0 0.0
  %1183 = vmatpush1.msra.mxu0 %v537
  %1184 = vmatprep.subr.mxu0 0.0
  %1185 = vmatpush1.msra.mxu0 %v538
  %1186 = vmatprep.subr.mxu0 0.0
  %1187 = vmatpush1.msra.mxu0 %v539
  %1188 = vmatprep.subr.mxu0 0.0
  %1189 = vmatpush1.msra.mxu0 %v540
  %1190 = vmatprep.subr.mxu0 0.0
  %1191 = vmatpush1.msra.mxu0 %v541
  %1192 = vmatprep.subr.mxu0 0.0
  %1193 = vmatpush1.msra.mxu0 %v542
  %1194 = vmatprep.subr.mxu0 0.0
  %1195 = vmatpush1.msra.mxu0 %v543
  %1196 = vmatprep.subr.mxu0 0.0
  %1197 = vmatpush1.msra.mxu0 %v544
  %1198 = vmatprep.subr.mxu0 0.0
  %1199 = vmatpush1.msra.mxu0 0.0
  %1200 = vmatprep.subr.mxu0 0.0
  %1201 = vmatpush1.msra.mxu0 0.0
  %1202 = vmatprep.subr.mxu0 0.0
  %1203 = vmatpush1.msra.mxu0 0.0
  %1204 = vmatprep.subr.mxu0 0.0
  %1205 = vmatpush1.msra.mxu0 0.0
  %1206 = vmatprep.subr.mxu0 0.0
  %1207 = vmatpush1.msra.mxu0 0.0
  %1208 = vmatprep.subr.mxu0 0.0
  %1209 = vmatpush1.msra.mxu0 0.0
  %1210 = vmatprep.subr.mxu0 0.0
  %1211 = vmatpush1.msra.mxu0 0.0
  %1212 = vmatprep.subr.mxu0 0.0
  %1213 = vmatpush1.msra.mxu0 0.0
  %1214 = vmatprep.subr.mxu0 0.0
  %1215 = vmatpush1.msra.mxu0 0.0
  %1216 = vmatprep.subr.mxu0 0.0
  %1217 = vmatpush1.msra.mxu0 0.0
  %1218 = vmatprep.subr.mxu0 0.0
  %1219 = vmatpush1.msra.mxu0 0.0
  %1220 = vmatprep.subr.mxu0 0.0
  %1221 = vmatpush1.msra.mxu0 0.0
  %1222 = vmatprep.subr.mxu0 0.0
  %1223 = vmatpush1.msra.mxu0 0.0
  %1224 = vmatprep.subr.mxu0 0.0
  %1225 = vmatpush1.msra.mxu0 0.0
  %1226 = vmatprep.subr.mxu0 0.0
  %1227 = vmatpush1.msra.mxu0 0.0
  %1228 = vmatprep.subr.mxu0 0.0
  %1229 = vmatpush1.msra.mxu0 0.0
  %1230 = vmatprep.mubr.f32.mxu0 0.0
  %1231 = vmatmul.mubr.f32.gmra.mrb[0].mxu0 %v1162
  %v1232 = vpop.f32.mrb[0].mxu0
  %v1233 = vadd.f32 0.0, %v1232
  %v1234 = vpop.f32.mrb[0].mxu0
  %1235 = vmatprep.mubr.f32.mxu0 0.0
  %1236 = vmatmul.mubr.f32.gmra.mrb[0].mxu0 %v1163
  %v1237 = vpop.f32.mrb[0].mxu0
  %v1238 = vadd.f32 0.0, %v1237
  %v1239 = vpop.f32.mrb[0].mxu0
  %1240 = vmatprep.mubr.f32.mxu0 0.0
  %1241 = vmatmul.mubr.f32.gmra.mrb[0].mxu0 %v1164
  %v1242 = vpop.f32.mrb[0].mxu0
  %v1243 = vadd.f32 0.0, %v1242
  %v1244 = vpop.f32.mrb[0].mxu0
  %1245 = vmatprep.mubr.f32.mxu0 0.0
  %1246 = vmatmul.mubr.f32.gmra.mrb[0].mxu0 %v1165
  %v1247 = vpop.f32.mrb[0].mxu0
  %v1248 = vadd.f32 0.0, %v1247
  %v1249 = vpop.f32.mrb[0].mxu0
  %1250 = vdwg.mxu0
  %v1251 = vadd.f32 %v1233, %v1238
  %v1252 = vadd.f32 %v1251, %v1243
  %v1253 = vadd.f32 %v1252, %v1248
  %v1254 = vrot.slane %v1253, 4
  %v1255 = vadd.f32 %v1253, %v1254
  %v1256 = vrot.slane %v1255, 2
  %v1257 = vadd.f32 %v1255, %v1256
  %v1258 = vrot.slane %v1257, 1
  %v1259 = vadd.f32 %v1257, %v1258
  %v1260 = vmul.f32 %v1259, 0.001953125
  %v1261 = vld [vmem:[%s9] sm:$0x1]
  %v1262 = vadd.f32 %v1260, 1e-05
  %v1263 = vrsqrt.pop %v1262
  %v1264 = vmul.f32 %v1261, %v1263
  %v1265 = vld [vmem:[%s11] sm:$0x1]
  %v1266 = vmul.f32 %v1157, %v1264
  %v1267 = vsub.f32 %v1265, %v1266
  %v1269 = vlaneseq
  %v1270 = vshrl.u32 %v1269, 7
  %v1271 = vsub.s32 0, %v1270
  %v1272 = vrot.slane %v1264, %v1271
  %v1274 = vmul.f32 %v1049, %v1272
  %v1275 = vmul.f32 %v1052, %v1272
  %v1276 = vmul.f32 %v1057, %v1272
  %v1277 = vmul.f32 %v1060, %v1272
  %v1279 = vlaneseq
  %v1280 = vshrl.u32 %v1279, 7
  %v1281 = vsub.s32 0, %v1280
  %v1282 = vrot.slane %v1267, %v1281
  %v1284 = vadd.f32 %v1274, %v1282
  %v1285 = vadd.f32 %v1275, %v1282
  %v1286 = vadd.f32 %v1276, %v1282
  %v1287 = vadd.f32 %v1277, %v1282
  %v1288 = vmax.f32 %v1284, 0.0
  %v1289 = vmax.f32 %v1285, 0.0
  %v1290 = vmax.f32 %v1286, 0.0
  %v1291 = vmax.f32 %v1287, 0.0
  %1292 = vst [vmem:[%s13] sm:$0xff] %v1288
  %1293 = vst [vmem:[%s13 + $0x8] sm:$0xff] %v1289
  %1294 = vst [vmem:[%s13 + $0x10] sm:$0xff] %v1290
  %1295 = vst [vmem:[%s13 + $0x18] sm:$0xff] %v1291
  // Predicated region
  $region50: #{forward.1} parent=0 // pred_check
    _
  $region51: #{forward.1} parent=0 // pred_check_branch
    %1297 = sbr.rel (0) target = $region53
  $region52: #{forward.1} parent=0 // pred_region
    _
  $region53: #{forward.1} parent=0 // pred_fallthru
    _
  // Predicated region
  $region54: #{forward.1} parent=0 // pred_check
    _
  $region55: #{forward.1} parent=0 // pred_check_branch
    %1299 = sbr.rel (0) target = $region57
  $region56: #{forward.1} parent=0 // pred_region
    _
  $region57: #{forward.1} parent=0 // pred_fallthru
    _
  // Predicated region
  $region58: #{forward.1} parent=0 // pred_check
    _
  $region59: #{forward.1} parent=0 // pred_check_branch
    %1301 = sbr.rel (0) target = $region61
  $region60: #{forward.1} parent=0 // pred_region
    _
  $region61: #{forward.1} parent=0 // pred_fallthru
    _
  // Predicated region
  $region62: #{forward.1} parent=0 // pred_check
    _
  $region63: #{forward.1} parent=0 // pred_check_branch
    %1303 = sbr.rel (0) target = $region65
  $region64: #{forward.1} parent=0 // pred_region
    _
  $region65: #{forward.1} parent=0 // pred_fallthru
    _

</llo_original>
